<compile_context>
chip_gen: v5e
topology: v5e:2x2
jax: 0.10.0
libtpu: 0.0.40
codegen_flags: <defaults>
</compile_context>

<pallas_src>
import functools

import jax
import jax.numpy as jnp
from jax.experimental import pallas as pl
from jax.experimental.pallas import tpu as pltpu

CHANNEL_BASICS = 50
N_LAYERS = 4
IN_DIM = 4
OUT_DIM = 4


def _beltrami_kernel(x_ref, y_ref, z_ref, t_ref, w0_ref, b0_ref, wh_ref,
                     bh_ref, wo_ref, bo_ref, o_ref, *, n_layers, n_chunks):
    # Tile shapes (feature-major):
    #   x/y/z/t_ref : (1, tm)        w0_ref: (C, 4)      b0_ref: (C, 1)
    #   wh_ref      : (L, C, C)      bh_ref: (L, C, 1)
    #   wo_ref      : (4, C)         bo_ref: (4, 1)      o_ref : (4, tm)
    width = o_ref.shape[-1]
    chunk = width // n_chunks           # multiple of 128 by construction
    hp = jax.lax.Precision.HIGHEST

    # Hoist the (tiny) weight/bias loads out of the chunk loop.
    w0 = w0_ref[...]                                     # (C, 4)
    w0c = [w0[:, j:j + 1] for j in range(IN_DIM)]        # 4 x (C, 1)
    b0 = b0_ref[...]                                     # (C, 1)
    whs = [wh_ref[i] for i in range(n_layers)]           # (C, C) each
    bhs = [bh_ref[i] for i in range(n_layers)]           # (C, 1) each
    wo = wo_ref[...]                                     # (4, C)
    bo = bo_ref[...]                                     # (4, 1)

    # Static unroll over independent lane sub-chunks: each chunk runs the full
    # 6-layer chain, so the scheduler can overlap MXU (vmatmul) of one chunk
    # with EUP (tanh) of another.
    for c in range(n_chunks):
        sl = slice(c * chunk, (c + 1) * chunk)           # 128-aligned, static
        # First layer (K=4) on the VPU: 4 broadcast FMAs. Keeps the MXU free
        # (a K=4 matmul would still occupy a full tm-column MXU stream).
        pre = (w0c[0] * x_ref[:, sl] + w0c[1] * y_ref[:, sl]
               + w0c[2] * z_ref[:, sl] + w0c[3] * t_ref[:, sl] + b0)
        h = jnp.tanh(pre)                                # (C, chunk)
        for i in range(n_layers):                        # static unroll
            h = jnp.tanh(
                jnp.dot(whs[i], h, preferred_element_type=jnp.float32,
                        precision=hp) + bhs[i])          # (C,1) bcast on lanes
        out = jnp.dot(wo, h, preferred_element_type=jnp.float32,
                      precision=hp) + bo                 # (4, chunk)
        o_ref[:, sl] = out.astype(o_ref.dtype)


def beltrami_forward(x, y, z, t, params, *, tm=8192):
    """Pallas forward pass. x, y, z, t: arbitrary (identical) shapes."""
    ini_shape = x.shape
    # Four separate lane-dense (1, N) inputs: no stack/interleave HBM pass.
    xs = [a.reshape(1, -1).astype(jnp.float32) for a in (x, y, z, t)]
    n = xs[0].shape[1]

    # --- choose grid / tile geometry -------------------------------------
    tm = max(128, tm)
    T = pl.cdiv(n, 128)                        # total 128-lane tiles needed
    steps = pl.cdiv(T * 128, tm)               # steps at the requested tile
    if T >= 2:
        # >=2 steps so the "parallel" axis can shard across v7x's 2 TCs; once
        # there is enough work, >=4 steps so each core also pipelines DMA.
        steps = max(steps, 4 if T >= 32 else 2)
        if steps % 2:
            steps += 1                         # balanced split across 2 TCs
    tiles_per_step = pl.cdiv(T, steps)
    tm_eff = tiles_per_step * 128
    n_pad = steps * tm_eff
    if n_pad != n:
        xs = [jnp.pad(a, ((0, 0), (0, n_pad - n))) for a in xs]

    # Sub-chunk count inside the kernel: 2-4 independent chains, each >=1024
    # points, and chunk width a multiple of 128.
    n_chunks = 1
    for cand in (4, 3, 2):
        if tiles_per_step % cand == 0 and tiles_per_step // cand >= 8:
            n_chunks = cand
            break

    w0, b0, wh, bh, wo, bo = (params["w0"], params["b0"], params["wh"],
                              params["bh"], params["wo"], params["bo"])
    C = w0.shape[0]
    L = wh.shape[0]

    kernel = functools.partial(_beltrami_kernel, n_layers=L,
                               n_chunks=n_chunks)

    flops_per_point = 2 * (IN_DIM * C + L * C * C + C * OUT_DIM)
    cost = pl.CostEstimate(
        flops=flops_per_point * n_pad,
        transcendentals=(L + 1) * C * n_pad,
        bytes_accessed=(IN_DIM + OUT_DIM) * 4 * n_pad)

    vec_spec = pl.BlockSpec((1, tm_eff), lambda i: (0, i))

    out = pl.pallas_call(
        kernel,
        out_shape=jax.ShapeDtypeStruct((OUT_DIM, n_pad), jnp.float32),
        grid_spec=pl.GridSpec(
            grid=(steps,),
            in_specs=[
                vec_spec, vec_spec, vec_spec, vec_spec,
                # Constant-index weight blocks: resident in VMEM, no re-DMA.
                pl.BlockSpec((C, IN_DIM), lambda i: (0, 0)),
                pl.BlockSpec((C, 1), lambda i: (0, 0)),
                pl.BlockSpec((L, C, C), lambda i: (0, 0, 0)),
                pl.BlockSpec((L, C, 1), lambda i: (0, 0, 0)),
                pl.BlockSpec((OUT_DIM, C), lambda i: (0, 0)),
                pl.BlockSpec((OUT_DIM, 1), lambda i: (0, 0)),
            ],
            out_specs=pl.BlockSpec((OUT_DIM, tm_eff), lambda i: (0, i)),
        ),
        compiler_params=pltpu.CompilerParams(
            dimension_semantics=("parallel",)),
        cost_estimate=cost,
    )(*xs, w0, b0, wh, bh, wo, bo)

    # Back to point-major (N, 4) to match the PyTorch module's output layout.
    out = out[:, :n].T
    return out.reshape(ini_shape + (OUT_DIM,))


def init_params(key, channel_basics=CHANNEL_BASICS, n_layers=N_LAYERS):
    """Deterministic synthetic parameter init (uniform, Linear-like scales).

    Weights are stored in PyTorch (out_features, in_features) orientation;
    biases are feature-major column vectors so the kernel's per-layer add
    broadcasts with no reshape.
    """
    ks = jax.random.split(key, 6)
    C = channel_basics

    def u(k, shape, fan_in):
        bound = 1.0 / jnp.sqrt(fan_in)
        return jax.random.uniform(k, shape, jnp.float32, -bound, bound)

    return {
        "w0": u(ks[0], (C, IN_DIM), IN_DIM),       # (out, in)
        "b0": u(ks[1], (C, 1), IN_DIM),
        "wh": u(ks[2], (n_layers, C, C), C),       # per-layer (out, in)
        "bh": u(ks[3], (n_layers, C, 1), C),
        "wo": u(ks[4], (OUT_DIM, C), C),
        "bo": u(ks[5], (OUT_DIM, 1), C),
    }


def beltrami_reference(x, y, z, t, params):
    """Plain-JAX reference of the PyTorch forward pass (x @ W.T + b)."""
    hp = jax.lax.Precision.HIGHEST
    X = jnp.stack([x, y, z, t], axis=-1).astype(jnp.float32)   # (N, 4)
    h = jnp.tanh(jnp.dot(X, params["w0"].T, precision=hp)
                 + params["b0"][:, 0])
    for i in range(params["wh"].shape[0]):
        h = jnp.tanh(jnp.dot(h, params["wh"][i].T, precision=hp)
                     + params["bh"][i, :, 0])
    return jnp.dot(h, params["wo"].T, precision=hp) + params["bo"][:, 0]


if __name__ == "__main__":
    key = jax.random.PRNGKey(0)
    kp, kx, ky, kz, kt = jax.random.split(key, 5)

    params = init_params(kp)

    N = 256  # number of collocation points (x, y, z, t each shape [N])
    x = jax.random.normal(kx, (N,), jnp.float32)
    y = jax.random.normal(ky, (N,), jnp.float32)
    z = jax.random.normal(kz, (N,), jnp.float32)
    t = jax.random.normal(kt, (N,), jnp.float32)

    out = beltrami_forward(x, y, z, t, params)
    out = jax.block_until_ready(out)

    ref = beltrami_reference(x, y, z, t, params)
    assert out.shape == (N, OUT_DIM), out.shape
    assert jnp.allclose(out, ref, atol=1e-5, rtol=1e-5), \
        float(jnp.max(jnp.abs(out - ref)))

    print("KERNEL_OK")
</pallas_src>

<mosaic_0001>
module attributes {stable_mosaic.version = 11 : i64} {
  func.func @_beltrami_kernel(%arg0: i32, %arg1: memref<1x128xf32, #tpu.memory_space<vmem>>, %arg2: memref<1x128xf32, #tpu.memory_space<vmem>>, %arg3: memref<1x128xf32, #tpu.memory_space<vmem>>, %arg4: memref<1x128xf32, #tpu.memory_space<vmem>>, %arg5: memref<50x4xf32, #tpu.memory_space<vmem>>, %arg6: memref<50x1xf32, #tpu.memory_space<vmem>>, %arg7: memref<4x50x50xf32, #tpu.memory_space<vmem>>, %arg8: memref<4x50x1xf32, #tpu.memory_space<vmem>>, %arg9: memref<4x50xf32, #tpu.memory_space<vmem>>, %arg10: memref<4x1xf32, #tpu.memory_space<vmem>>, %arg11: memref<4x128xf32, #tpu.memory_space<vmem>>) attributes {dimension_semantics = [#tpu.dimension_semantics<parallel>], iteration_bounds = array<i64: 2>, scalar_prefetch = 0 : i64, scratch_operands = 0 : i64, tpu.core_type = #tpu.core_type<tc>, window_params = [{transform_indices = @transform_0, window_bounds = array<i64: 1, 128>}, {transform_indices = @transform_1, window_bounds = array<i64: 1, 128>}, {transform_indices = @transform_2, window_bounds = array<i64: 1, 128>}, {transform_indices = @transform_3, window_bounds = array<i64: 1, 128>}, {pipeline_mode = #tpu.pipeline_mode<synchronous>, transform_indices = @transform_4, window_bounds = array<i64: 50, 4>}, {pipeline_mode = #tpu.pipeline_mode<synchronous>, transform_indices = @transform_5, window_bounds = array<i64: 50, 1>}, {pipeline_mode = #tpu.pipeline_mode<synchronous>, transform_indices = @transform_6, window_bounds = array<i64: 4, 50, 50>}, {pipeline_mode = #tpu.pipeline_mode<synchronous>, transform_indices = @transform_7, window_bounds = array<i64: 4, 50, 1>}, {pipeline_mode = #tpu.pipeline_mode<synchronous>, transform_indices = @transform_8, window_bounds = array<i64: 4, 50>}, {pipeline_mode = #tpu.pipeline_mode<synchronous>, transform_indices = @transform_9, window_bounds = array<i64: 4, 1>}, {transform_indices = @transform_10, window_bounds = array<i64: 4, 128>}]} {
    %c0 = arith.constant 0 : index
    %c0_0 = arith.constant 0 : index
    %0 = vector.load %arg5[%c0, %c0_0] : memref<50x4xf32, #tpu.memory_space<vmem>>, vector<50x4xf32>
    %1 = vector.extract_strided_slice %0 {offsets = [0, 0], sizes = [50, 1], strides = [1, 1]} : vector<50x4xf32> to vector<50x1xf32>
    %2 = vector.extract_strided_slice %0 {offsets = [0, 1], sizes = [50, 1], strides = [1, 1]} : vector<50x4xf32> to vector<50x1xf32>
    %3 = vector.extract_strided_slice %0 {offsets = [0, 2], sizes = [50, 1], strides = [1, 1]} : vector<50x4xf32> to vector<50x1xf32>
    %4 = vector.extract_strided_slice %0 {offsets = [0, 3], sizes = [50, 1], strides = [1, 1]} : vector<50x4xf32> to vector<50x1xf32>
    %c0_1 = arith.constant 0 : index
    %c0_2 = arith.constant 0 : index
    %5 = vector.load %arg6[%c0_1, %c0_2] : memref<50x1xf32, #tpu.memory_space<vmem>>, vector<50x1xf32>
    %c0_3 = arith.constant 0 : index
    %c0_4 = arith.constant 0 : index
    %c0_5 = arith.constant 0 : index
    %6 = vector.load %arg7[%c0_3, %c0_4, %c0_5] : memref<4x50x50xf32, #tpu.memory_space<vmem>>, vector<1x50x50xf32>
    %7 = vector.shape_cast %6 : vector<1x50x50xf32> to vector<50x50xf32>
    %c1 = arith.constant 1 : index
    %c0_6 = arith.constant 0 : index
    %c0_7 = arith.constant 0 : index
    %8 = vector.load %arg7[%c1, %c0_6, %c0_7] : memref<4x50x50xf32, #tpu.memory_space<vmem>>, vector<1x50x50xf32>
    %9 = vector.shape_cast %8 : vector<1x50x50xf32> to vector<50x50xf32>
    %c2 = arith.constant 2 : index
    %c0_8 = arith.constant 0 : index
    %c0_9 = arith.constant 0 : index
    %10 = vector.load %arg7[%c2, %c0_8, %c0_9] : memref<4x50x50xf32, #tpu.memory_space<vmem>>, vector<1x50x50xf32>
    %11 = vector.shape_cast %10 : vector<1x50x50xf32> to vector<50x50xf32>
    %c3 = arith.constant 3 : index
    %c0_10 = arith.constant 0 : index
    %c0_11 = arith.constant 0 : index
    %12 = vector.load %arg7[%c3, %c0_10, %c0_11] : memref<4x50x50xf32, #tpu.memory_space<vmem>>, vector<1x50x50xf32>
    %13 = vector.shape_cast %12 : vector<1x50x50xf32> to vector<50x50xf32>
    %c0_12 = arith.constant 0 : index
    %c0_13 = arith.constant 0 : index
    %c0_14 = arith.constant 0 : index
    %14 = vector.load %arg8[%c0_12, %c0_13, %c0_14] : memref<4x50x1xf32, #tpu.memory_space<vmem>>, vector<1x50x1xf32>
    %15 = vector.shape_cast %14 : vector<1x50x1xf32> to vector<50x1xf32>
    %c1_15 = arith.constant 1 : index
    %c0_16 = arith.constant 0 : index
    %c0_17 = arith.constant 0 : index
    %16 = vector.load %arg8[%c1_15, %c0_16, %c0_17] : memref<4x50x1xf32, #tpu.memory_space<vmem>>, vector<1x50x1xf32>
    %17 = vector.shape_cast %16 : vector<1x50x1xf32> to vector<50x1xf32>
    %c2_18 = arith.constant 2 : index
    %c0_19 = arith.constant 0 : index
    %c0_20 = arith.constant 0 : index
    %18 = vector.load %arg8[%c2_18, %c0_19, %c0_20] : memref<4x50x1xf32, #tpu.memory_space<vmem>>, vector<1x50x1xf32>
    %19 = vector.shape_cast %18 : vector<1x50x1xf32> to vector<50x1xf32>
    %c3_21 = arith.constant 3 : index
    %c0_22 = arith.constant 0 : index
    %c0_23 = arith.constant 0 : index
    %20 = vector.load %arg8[%c3_21, %c0_22, %c0_23] : memref<4x50x1xf32, #tpu.memory_space<vmem>>, vector<1x50x1xf32>
    %21 = vector.shape_cast %20 : vector<1x50x1xf32> to vector<50x1xf32>
    %c0_24 = arith.constant 0 : index
    %c0_25 = arith.constant 0 : index
    %22 = vector.load %arg9[%c0_24, %c0_25] : memref<4x50xf32, #tpu.memory_space<vmem>>, vector<4x50xf32>
    %c0_26 = arith.constant 0 : index
    %c0_27 = arith.constant 0 : index
    %23 = vector.load %arg10[%c0_26, %c0_27] : memref<4x1xf32, #tpu.memory_space<vmem>>, vector<4x1xf32>
    %c0_28 = arith.constant 0 : index
    %c0_29 = arith.constant 0 : index
    %24 = vector.load %arg1[%c0_28, %c0_29] : memref<1x128xf32, #tpu.memory_space<vmem>>, vector<1x128xf32>
    %25 = vector.broadcast %1 : vector<50x1xf32> to vector<50x128xf32>
    %26 = vector.broadcast %24 : vector<1x128xf32> to vector<50x128xf32>
    %27 = arith.mulf %25, %26 : vector<50x128xf32>
    %c0_30 = arith.constant 0 : index
    %c0_31 = arith.constant 0 : index
    %28 = vector.load %arg2[%c0_30, %c0_31] : memref<1x128xf32, #tpu.memory_space<vmem>>, vector<1x128xf32>
    %29 = vector.broadcast %2 : vector<50x1xf32> to vector<50x128xf32>
    %30 = vector.broadcast %28 : vector<1x128xf32> to vector<50x128xf32>
    %31 = arith.mulf %29, %30 : vector<50x128xf32>
    %32 = arith.addf %27, %31 : vector<50x128xf32>
    %c0_32 = arith.constant 0 : index
    %c0_33 = arith.constant 0 : index
    %33 = vector.load %arg3[%c0_32, %c0_33] : memref<1x128xf32, #tpu.memory_space<vmem>>, vector<1x128xf32>
    %34 = vector.broadcast %3 : vector<50x1xf32> to vector<50x128xf32>
    %35 = vector.broadcast %33 : vector<1x128xf32> to vector<50x128xf32>
    %36 = arith.mulf %34, %35 : vector<50x128xf32>
    %37 = arith.addf %32, %36 : vector<50x128xf32>
    %c0_34 = arith.constant 0 : index
    %c0_35 = arith.constant 0 : index
    %38 = vector.load %arg4[%c0_34, %c0_35] : memref<1x128xf32, #tpu.memory_space<vmem>>, vector<1x128xf32>
    %39 = vector.broadcast %4 : vector<50x1xf32> to vector<50x128xf32>
    %40 = vector.broadcast %38 : vector<1x128xf32> to vector<50x128xf32>
    %41 = arith.mulf %39, %40 : vector<50x128xf32>
    %42 = arith.addf %37, %41 : vector<50x128xf32>
    %43 = vector.broadcast %5 : vector<50x1xf32> to vector<50x128xf32>
    %44 = arith.addf %42, %43 : vector<50x128xf32>
    %45 = math.tanh %44 : vector<50x128xf32>
    %cst = arith.constant dense<0.000000e+00> : vector<50x128xf32>
    %46 = tpu.matmul %7, %45, %cst {dimension_numbers = #tpu.dot_dimension_numbers<[1], [0], [0], [1], [0, 0, 1, 1], [], []>, precision = #tpu.contract_precision<fp32>} : vector<50x50xf32>, vector<50x128xf32>, vector<50x128xf32> -> vector<50x128xf32>
    %47 = vector.broadcast %15 : vector<50x1xf32> to vector<50x128xf32>
    %48 = arith.addf %46, %47 : vector<50x128xf32>
    %49 = math.tanh %48 : vector<50x128xf32>
    %cst_36 = arith.constant dense<0.000000e+00> : vector<50x128xf32>
    %50 = tpu.matmul %9, %49, %cst_36 {dimension_numbers = #tpu.dot_dimension_numbers<[1], [0], [0], [1], [0, 0, 1, 1], [], []>, precision = #tpu.contract_precision<fp32>} : vector<50x50xf32>, vector<50x128xf32>, vector<50x128xf32> -> vector<50x128xf32>
    %51 = vector.broadcast %17 : vector<50x1xf32> to vector<50x128xf32>
    %52 = arith.addf %50, %51 : vector<50x128xf32>
    %53 = math.tanh %52 : vector<50x128xf32>
    %cst_37 = arith.constant dense<0.000000e+00> : vector<50x128xf32>
    %54 = tpu.matmul %11, %53, %cst_37 {dimension_numbers = #tpu.dot_dimension_numbers<[1], [0], [0], [1], [0, 0, 1, 1], [], []>, precision = #tpu.contract_precision<fp32>} : vector<50x50xf32>, vector<50x128xf32>, vector<50x128xf32> -> vector<50x128xf32>
    %55 = vector.broadcast %19 : vector<50x1xf32> to vector<50x128xf32>
    %56 = arith.addf %54, %55 : vector<50x128xf32>
    %57 = math.tanh %56 : vector<50x128xf32>
    %cst_38 = arith.constant dense<0.000000e+00> : vector<50x128xf32>
    %58 = tpu.matmul %13, %57, %cst_38 {dimension_numbers = #tpu.dot_dimension_numbers<[1], [0], [0], [1], [0, 0, 1, 1], [], []>, precision = #tpu.contract_precision<fp32>} : vector<50x50xf32>, vector<50x128xf32>, vector<50x128xf32> -> vector<50x128xf32>
    %59 = vector.broadcast %21 : vector<50x1xf32> to vector<50x128xf32>
    %60 = arith.addf %58, %59 : vector<50x128xf32>
    %61 = math.tanh %60 : vector<50x128xf32>
    %cst_39 = arith.constant dense<0.000000e+00> : vector<4x128xf32>
    %62 = tpu.matmul %22, %61, %cst_39 {dimension_numbers = #tpu.dot_dimension_numbers<[1], [0], [0], [1], [0, 0, 1, 1], [], []>, precision = #tpu.contract_precision<fp32>} : vector<4x50xf32>, vector<50x128xf32>, vector<4x128xf32> -> vector<4x128xf32>
    %63 = vector.broadcast %23 : vector<4x1xf32> to vector<4x128xf32>
    %64 = arith.addf %62, %63 : vector<4x128xf32>
    %c0_40 = arith.constant 0 : index
    %c0_41 = arith.constant 0 : index
    %65 = vector.load %arg11[%c0_40, %c0_41] : memref<4x128xf32, #tpu.memory_space<vmem>>, vector<4x128xf32>
    tpu.vector_store %arg11[%c0_40, %c0_41], %64 {strides = array<i32>} : memref<4x128xf32, #tpu.memory_space<vmem>>, vector<4x128xf32>,
    return
  }
  func.func @transform_0(%arg0: i32) -> (i32, i32) {
    %c0_i32 = arith.constant 0 : i32
    %c0_i32_0 = arith.constant 0 : i32
    return %c0_i32, %arg0 : i32, i32
  }
  func.func @transform_1(%arg0: i32) -> (i32, i32) {
    %c0_i32 = arith.constant 0 : i32
    %c0_i32_0 = arith.constant 0 : i32
    return %c0_i32, %arg0 : i32, i32
  }
  func.func @transform_2(%arg0: i32) -> (i32, i32) {
    %c0_i32 = arith.constant 0 : i32
    %c0_i32_0 = arith.constant 0 : i32
    return %c0_i32, %arg0 : i32, i32
  }
  func.func @transform_3(%arg0: i32) -> (i32, i32) {
    %c0_i32 = arith.constant 0 : i32
    %c0_i32_0 = arith.constant 0 : i32
    return %c0_i32, %arg0 : i32, i32
  }
  func.func @transform_4(%arg0: i32) -> (i32, i32) {
    %c0_i32 = arith.constant 0 : i32
    %c0_i32_0 = arith.constant 0 : i32
    %c0_i32_1 = arith.constant 0 : i32
    return %c0_i32, %c0_i32_0 : i32, i32
  }
  func.func @transform_5(%arg0: i32) -> (i32, i32) {
    %c0_i32 = arith.constant 0 : i32
    %c0_i32_0 = arith.constant 0 : i32
    %c0_i32_1 = arith.constant 0 : i32
    return %c0_i32, %c0_i32_0 : i32, i32
  }
  func.func @transform_6(%arg0: i32) -> (i32, i32, i32) {
    %c0_i32 = arith.constant 0 : i32
    %c0_i32_0 = arith.constant 0 : i32
    %c0_i32_1 = arith.constant 0 : i32
    %c0_i32_2 = arith.constant 0 : i32
    return %c0_i32, %c0_i32_0, %c0_i32_1 : i32, i32, i32
  }
  func.func @transform_7(%arg0: i32) -> (i32, i32, i32) {
    %c0_i32 = arith.constant 0 : i32
    %c0_i32_0 = arith.constant 0 : i32
    %c0_i32_1 = arith.constant 0 : i32
    %c0_i32_2 = arith.constant 0 : i32
    return %c0_i32, %c0_i32_0, %c0_i32_1 : i32, i32, i32
  }
  func.func @transform_8(%arg0: i32) -> (i32, i32) {
    %c0_i32 = arith.constant 0 : i32
    %c0_i32_0 = arith.constant 0 : i32
    %c0_i32_1 = arith.constant 0 : i32
    return %c0_i32, %c0_i32_0 : i32, i32
  }
  func.func @transform_9(%arg0: i32) -> (i32, i32) {
    %c0_i32 = arith.constant 0 : i32
    %c0_i32_0 = arith.constant 0 : i32
    %c0_i32_1 = arith.constant 0 : i32
    return %c0_i32, %c0_i32_0 : i32, i32
  }
  func.func @transform_10(%arg0: i32) -> (i32, i32) {
    %c0_i32 = arith.constant 0 : i32
    %c0_i32_0 = arith.constant 0 : i32
    return %c0_i32, %arg0 : i32, i32
  }
}

</mosaic_0001>

<llo_original>
// kernel: tpu_custom_call.1
$region0: #{tpu_custom_call.1}
  #allocation0 [shape = 'u32[]', space=smem, size = 0x4, offset = 0x4, fixed_abs, tag = 'smem constant byte address 0x4 - core index']
  #allocation1 [shape = 'u32[72,128]{1,0:T(1,128)}', space=vmem, size = 0x9000, scoped, tag = 'internal scratch']
  %s0 = inlined_call_operand.vmem [shape: f32[1,256], index: 0, kind: input, shape index: {}]
  %s1 = inlined_call_operand.vmem [shape: f32[1,256], index: 1, kind: input, shape index: {}]
  %s2 = inlined_call_operand.vmem [shape: f32[1,256], index: 2, kind: input, shape index: {}]
  %s3 = inlined_call_operand.vmem [shape: f32[1,256], index: 3, kind: input, shape index: {}]
  %s4 = inlined_call_operand.vmem [shape: f32[50,4], index: 4, kind: input, shape index: {}]
  %s5 = inlined_call_operand.vmem [shape: f32[50,1], index: 5, kind: input, shape index: {}]
  %s6 = inlined_call_operand.vmem [shape: f32[4,50,50], index: 6, kind: input, shape index: {}]
  %s7 = inlined_call_operand.vmem [shape: f32[4,50,1], index: 7, kind: input, shape index: {}]
  %s8 = inlined_call_operand.vmem [shape: f32[4,50], index: 8, kind: input, shape index: {}]
  %s9 = inlined_call_operand.vmem [shape: f32[4,1], index: 9, kind: input, shape index: {}]
  %s10 = inlined_call_operand.hbm [shape: f32[4,256], index: 10, kind: output, shape index: {}]
  %s11 = sld [smem:[#allocation0]]
  $region73: #{tpu_custom_call.1} parent=0
    _
  %s13 = ssub.s32 1, %s11
  %s14 = scalar_select 0, %s13, %s11
  $region1: #{tpu_custom_call.1} parent=0
    #allocation2 [shape = 'u8[4096]{0}', space=vmem, size = 0x1000, scoped, tag = 'output window, operand 0']
    #allocation3 [shape = 's32[2]{0}', space=sflag, size = 0x8, scoped, tag = 'scoped memory for tpu_custom_call.1']
    %15 = vsyncpa [#allocation3], 0
    %s16 = scalar_lea.sflag [#allocation3], 1
    %17 = vsyncpa %s16, 0
    loop: start=0, step=1, limit=4
    $region2: #{tpu_custom_call.1} parent=1 // loop_pre_header
      _
    $region3: #{tpu_custom_call.1} parent=1 // loop_header
      %s19 = sphi 0, %s23
      %p20 = scmp.ge.s32.totalorder %s19, 4
      %s29 = sphi 0, %s31
      %s32 = sphi 0, %s29
      %s33 = sphi 0, %s32
      %s49 = sphi 0, %s33
      %s55 = sphi 0, %s57
      %s58 = sphi 0, %s55
      %s59 = sphi 0, %s58
      %s75 = sphi 0, %s59
      %s81 = sphi 0, %s83
      %s84 = sphi 0, %s81
      %s85 = sphi 0, %s84
      %s101 = sphi 0, %s85
      %s107 = sphi 0, %s109
      %s110 = sphi 0, %s107
      %s111 = sphi 0, %s110
      %s127 = sphi 0, %s111
      %s131 = sphi 0, %s131
      %s133 = sphi 0, %s131
      %s134 = sphi 0, %s133
      %s148 = sphi 0, %s134
      %s152 = sphi 0, %s152
      %s154 = sphi 0, %s152
      %s155 = sphi 0, %s154
      %s169 = sphi 0, %s155
      %s173 = sphi 0, %s173
      %s175 = sphi 0, %s173
      %s176 = sphi 0, %s175
      %s190 = sphi 0, %s176
      %s194 = sphi 0, %s194
      %s196 = sphi 0, %s194
      %s197 = sphi 0, %s196
      %s211 = sphi 0, %s197
      %s215 = sphi 0, %s215
      %s217 = sphi 0, %s215
      %s218 = sphi 0, %s217
      %s232 = sphi 0, %s218
      %s236 = sphi 0, %s236
      %s238 = sphi 0, %s236
      %s239 = sphi 0, %s238
      %s253 = sphi 0, %s239
      %s259 = sphi 0, %s261
      %s262 = sphi 0, %s259
      %s263 = sphi 0, %s262
      %s279 = sphi 0, %s263
    $region4: #{tpu_custom_call.1} parent=1 // loop_header_branch
      %22 = sbr.rel (%p20) target = $region8
    $region5: #{tpu_custom_call.1} parent=1 // loop_body
      %s24 = ssub.s32 %s19, 1
      %s25 = ssub.s32 %s19, 2
      %s26 = sadd.s32 %s19, 1
      %s27 = ssub.s32 %s19, %s26
      %p28 = scmp.eq.s32.totalorder %s27, 0
      %s30 = sadd.s32 %s29, 1
      %s31 = scalar_select %p28, %s29, %s30
      %p34 = pneg %p28
      %p35 = scmp.eq.s32.totalorder %s19, 1
      %p36 = por %p34, %p35
      %p37 = scmp.ne.s32.totalorder %s29, %s32
      %p38 = scmp.eq.s32.totalorder %s19, 0
      %p39 = por %p37, %p38
      %p40 = scmp.ne.s32.totalorder %s29, %s32
      %p41 = scmp.eq.s32.totalorder %s24, 1
      %p42 = por %p40, %p41
      %p43 = scmp.ne.s32.totalorder %s32, %s33
      %p44 = scmp.eq.s32.totalorder %s24, 0
      %p45 = por %p43, %p44
      %p46 = scmp.ne.s32.totalorder %s32, %s33
      %p47 = scmp.eq.s32.totalorder %s25, 1
      %p48 = por %p46, %p47
      %p50 = scmp.ne.s32.totalorder %s33, %s49
      %p51 = scmp.eq.s32.totalorder %s25, 0
      %p52 = por %p50, %p51
      %s53 = ssub.s32 %s19, %s26
      %p54 = scmp.eq.s32.totalorder %s53, 0
      %s56 = sadd.s32 %s55, 1
      %s57 = scalar_select %p54, %s55, %s56
      %p60 = pneg %p54
      %p61 = scmp.eq.s32.totalorder %s19, 1
      %p62 = por %p60, %p61
      %p63 = scmp.ne.s32.totalorder %s55, %s58
      %p64 = scmp.eq.s32.totalorder %s19, 0
      %p65 = por %p63, %p64
      %p66 = scmp.ne.s32.totalorder %s55, %s58
      %p67 = scmp.eq.s32.totalorder %s24, 1
      %p68 = por %p66, %p67
      %p69 = scmp.ne.s32.totalorder %s58, %s59
      %p70 = scmp.eq.s32.totalorder %s24, 0
      %p71 = por %p69, %p70
      %p72 = scmp.ne.s32.totalorder %s58, %s59
      %p73 = scmp.eq.s32.totalorder %s25, 1
      %p74 = por %p72, %p73
      %p76 = scmp.ne.s32.totalorder %s59, %s75
      %p77 = scmp.eq.s32.totalorder %s25, 0
      %p78 = por %p76, %p77
      %s79 = ssub.s32 %s19, %s26
      %p80 = scmp.eq.s32.totalorder %s79, 0
      %s82 = sadd.s32 %s81, 1
      %s83 = scalar_select %p80, %s81, %s82
      %p86 = pneg %p80
      %p87 = scmp.eq.s32.totalorder %s19, 1
      %p88 = por %p86, %p87
      %p89 = scmp.ne.s32.totalorder %s81, %s84
      %p90 = scmp.eq.s32.totalorder %s19, 0
      %p91 = por %p89, %p90
      %p92 = scmp.ne.s32.totalorder %s81, %s84
      %p93 = scmp.eq.s32.totalorder %s24, 1
      %p94 = por %p92, %p93
      %p95 = scmp.ne.s32.totalorder %s84, %s85
      %p96 = scmp.eq.s32.totalorder %s24, 0
      %p97 = por %p95, %p96
      %p98 = scmp.ne.s32.totalorder %s84, %s85
      %p99 = scmp.eq.s32.totalorder %s25, 1
      %p100 = por %p98, %p99
      %p102 = scmp.ne.s32.totalorder %s85, %s101
      %p103 = scmp.eq.s32.totalorder %s25, 0
      %p104 = por %p102, %p103
      %s105 = ssub.s32 %s19, %s26
      %p106 = scmp.eq.s32.totalorder %s105, 0
      %s108 = sadd.s32 %s107, 1
      %s109 = scalar_select %p106, %s107, %s108
      %p112 = pneg %p106
      %p113 = scmp.eq.s32.totalorder %s19, 1
      %p114 = por %p112, %p113
      %p115 = scmp.ne.s32.totalorder %s107, %s110
      %p116 = scmp.eq.s32.totalorder %s19, 0
      %p117 = por %p115, %p116
      %p118 = scmp.ne.s32.totalorder %s107, %s110
      %p119 = scmp.eq.s32.totalorder %s24, 1
      %p120 = por %p118, %p119
      %p121 = scmp.ne.s32.totalorder %s110, %s111
      %p122 = scmp.eq.s32.totalorder %s24, 0
      %p123 = por %p121, %p122
      %p124 = scmp.ne.s32.totalorder %s110, %s111
      %p125 = scmp.eq.s32.totalorder %s25, 1
      %p126 = por %p124, %p125
      %p128 = scmp.ne.s32.totalorder %s111, %s127
      %p129 = scmp.eq.s32.totalorder %s25, 0
      %p130 = por %p128, %p129
      %s132 = sadd.s32 %s131, 1
      %p135 = scmp.eq.s32.totalorder %s19, 1
      %p136 = scmp.ne.s32.totalorder %s131, %s133
      %p137 = scmp.eq.s32.totalorder %s19, 0
      %p138 = por %p136, %p137
      %p139 = scmp.ne.s32.totalorder %s131, %s133
      %p140 = scmp.eq.s32.totalorder %s24, 1
      %p141 = por %p139, %p140
      %p142 = scmp.ne.s32.totalorder %s133, %s134
      %p143 = scmp.eq.s32.totalorder %s24, 0
      %p144 = por %p142, %p143
      %p145 = scmp.ne.s32.totalorder %s133, %s134
      %p146 = scmp.eq.s32.totalorder %s25, 1
      %p147 = por %p145, %p146
      %p149 = scmp.ne.s32.totalorder %s134, %s148
      %p150 = scmp.eq.s32.totalorder %s25, 0
      %p151 = por %p149, %p150
      %s153 = sadd.s32 %s152, 1
      %p156 = scmp.eq.s32.totalorder %s19, 1
      %p157 = scmp.ne.s32.totalorder %s152, %s154
      %p158 = scmp.eq.s32.totalorder %s19, 0
      %p159 = por %p157, %p158
      %p160 = scmp.ne.s32.totalorder %s152, %s154
      %p161 = scmp.eq.s32.totalorder %s24, 1
      %p162 = por %p160, %p161
      %p163 = scmp.ne.s32.totalorder %s154, %s155
      %p164 = scmp.eq.s32.totalorder %s24, 0
      %p165 = por %p163, %p164
      %p166 = scmp.ne.s32.totalorder %s154, %s155
      %p167 = scmp.eq.s32.totalorder %s25, 1
      %p168 = por %p166, %p167
      %p170 = scmp.ne.s32.totalorder %s155, %s169
      %p171 = scmp.eq.s32.totalorder %s25, 0
      %p172 = por %p170, %p171
      %s174 = sadd.s32 %s173, 1
      %p177 = scmp.eq.s32.totalorder %s19, 1
      %p178 = scmp.ne.s32.totalorder %s173, %s175
      %p179 = scmp.eq.s32.totalorder %s19, 0
      %p180 = por %p178, %p179
      %p181 = scmp.ne.s32.totalorder %s173, %s175
      %p182 = scmp.eq.s32.totalorder %s24, 1
      %p183 = por %p181, %p182
      %p184 = scmp.ne.s32.totalorder %s175, %s176
      %p185 = scmp.eq.s32.totalorder %s24, 0
      %p186 = por %p184, %p185
      %p187 = scmp.ne.s32.totalorder %s175, %s176
      %p188 = scmp.eq.s32.totalorder %s25, 1
      %p189 = por %p187, %p188
      %p191 = scmp.ne.s32.totalorder %s176, %s190
      %p192 = scmp.eq.s32.totalorder %s25, 0
      %p193 = por %p191, %p192
      %s195 = sadd.s32 %s194, 1
      %p198 = scmp.eq.s32.totalorder %s19, 1
      %p199 = scmp.ne.s32.totalorder %s194, %s196
      %p200 = scmp.eq.s32.totalorder %s19, 0
      %p201 = por %p199, %p200
      %p202 = scmp.ne.s32.totalorder %s194, %s196
      %p203 = scmp.eq.s32.totalorder %s24, 1
      %p204 = por %p202, %p203
      %p205 = scmp.ne.s32.totalorder %s196, %s197
      %p206 = scmp.eq.s32.totalorder %s24, 0
      %p207 = por %p205, %p206
      %p208 = scmp.ne.s32.totalorder %s196, %s197
      %p209 = scmp.eq.s32.totalorder %s25, 1
      %p210 = por %p208, %p209
      %p212 = scmp.ne.s32.totalorder %s197, %s211
      %p213 = scmp.eq.s32.totalorder %s25, 0
      %p214 = por %p212, %p213
      %s216 = sadd.s32 %s215, 1
      %p219 = scmp.eq.s32.totalorder %s19, 1
      %p220 = scmp.ne.s32.totalorder %s215, %s217
      %p221 = scmp.eq.s32.totalorder %s19, 0
      %p222 = por %p220, %p221
      %p223 = scmp.ne.s32.totalorder %s215, %s217
      %p224 = scmp.eq.s32.totalorder %s24, 1
      %p225 = por %p223, %p224
      %p226 = scmp.ne.s32.totalorder %s217, %s218
      %p227 = scmp.eq.s32.totalorder %s24, 0
      %p228 = por %p226, %p227
      %p229 = scmp.ne.s32.totalorder %s217, %s218
      %p230 = scmp.eq.s32.totalorder %s25, 1
      %p231 = por %p229, %p230
      %p233 = scmp.ne.s32.totalorder %s218, %s232
      %p234 = scmp.eq.s32.totalorder %s25, 0
      %p235 = por %p233, %p234
      %s237 = sadd.s32 %s236, 1
      %p240 = scmp.eq.s32.totalorder %s19, 1
      %p241 = scmp.ne.s32.totalorder %s236, %s238
      %p242 = scmp.eq.s32.totalorder %s19, 0
      %p243 = por %p241, %p242
      %p244 = scmp.ne.s32.totalorder %s236, %s238
      %p245 = scmp.eq.s32.totalorder %s24, 1
      %p246 = por %p244, %p245
      %p247 = scmp.ne.s32.totalorder %s238, %s239
      %p248 = scmp.eq.s32.totalorder %s24, 0
      %p249 = por %p247, %p248
      %p250 = scmp.ne.s32.totalorder %s238, %s239
      %p251 = scmp.eq.s32.totalorder %s25, 1
      %p252 = por %p250, %p251
      %p254 = scmp.ne.s32.totalorder %s239, %s253
      %p255 = scmp.eq.s32.totalorder %s25, 0
      %p256 = por %p254, %p255
      %s257 = ssub.s32 %s19, %s26
      %p258 = scmp.eq.s32.totalorder %s257, 0
      %s260 = sadd.s32 %s259, 1
      %s261 = scalar_select %p258, %s259, %s260
      %p264 = pneg %p258
      %p265 = scmp.eq.s32.totalorder %s19, 1
      %p266 = por %p264, %p265
      %p267 = scmp.ne.s32.totalorder %s259, %s262
      %p268 = scmp.eq.s32.totalorder %s19, 0
      %p269 = por %p267, %p268
      %p270 = scmp.ne.s32.totalorder %s259, %s262
      %p271 = scmp.eq.s32.totalorder %s24, 1
      %p272 = por %p270, %p271
      %p273 = scmp.ne.s32.totalorder %s262, %s263
      %p274 = scmp.eq.s32.totalorder %s24, 0
      %p275 = por %p273, %p274
      %p276 = scmp.ne.s32.totalorder %s262, %s263
      %p277 = scmp.eq.s32.totalorder %s25, 1
      %p278 = por %p276, %p277
      %p280 = scmp.ne.s32.totalorder %s263, %s279
      %p281 = scmp.eq.s32.totalorder %s25, 0
      %p282 = por %p280, %p281
      %p283 = scmp.le.s32.totalorder 1, %s19
      %p284 = scmp.lt.s32.totalorder %s19, 3
      %p285 = pnand %p283, %p284
      %p286 = pneg %p285
      // Predicated region
      $region9: #{tpu_custom_call.1} parent=5 // pred_check
        _
      $region10: #{tpu_custom_call.1} parent=5 // pred_check_branch
        %288 = sbr.rel (%p285) target = $region12
      $region11: #{tpu_custom_call.1} parent=5 // pred_region
        %s289 = ssub.s32 %s19, 1
        // Predicated region
        $region13: #{tpu_custom_call.1} parent=11 // pred_check
          %p290 = pneg %p144
        $region14: #{tpu_custom_call.1} parent=11 // pred_check_branch
          %292 = sbr.rel (%p290) target = $region16
        $region15: #{tpu_custom_call.1} parent=11 // pred_region
          _
        $region16: #{tpu_custom_call.1} parent=11 // pred_fallthru
          _
        // Predicated region
        $region17: #{tpu_custom_call.1} parent=11 // pred_check
          %p293 = pneg %p165
        $region18: #{tpu_custom_call.1} parent=11 // pred_check_branch
          %295 = sbr.rel (%p293) target = $region20
        $region19: #{tpu_custom_call.1} parent=11 // pred_region
          _
        $region20: #{tpu_custom_call.1} parent=11 // pred_fallthru
          _
        // Predicated region
        $region21: #{tpu_custom_call.1} parent=11 // pred_check
          %p296 = pneg %p186
        $region22: #{tpu_custom_call.1} parent=11 // pred_check_branch
          %298 = sbr.rel (%p296) target = $region24
        $region23: #{tpu_custom_call.1} parent=11 // pred_region
          _
        $region24: #{tpu_custom_call.1} parent=11 // pred_fallthru
          _
        // Predicated region
        $region25: #{tpu_custom_call.1} parent=11 // pred_check
          %p299 = pneg %p207
        $region26: #{tpu_custom_call.1} parent=11 // pred_check_branch
          %301 = sbr.rel (%p299) target = $region28
        $region27: #{tpu_custom_call.1} parent=11 // pred_region
          _
        $region28: #{tpu_custom_call.1} parent=11 // pred_fallthru
          _
        // Predicated region
        $region29: #{tpu_custom_call.1} parent=11 // pred_check
          %p302 = pneg %p228
        $region30: #{tpu_custom_call.1} parent=11 // pred_check_branch
          %304 = sbr.rel (%p302) target = $region32
        $region31: #{tpu_custom_call.1} parent=11 // pred_region
          _
        $region32: #{tpu_custom_call.1} parent=11 // pred_fallthru
          _
        // Predicated region
        $region33: #{tpu_custom_call.1} parent=11 // pred_check
          %p305 = pneg %p249
        $region34: #{tpu_custom_call.1} parent=11 // pred_check_branch
          %307 = sbr.rel (%p305) target = $region36
        $region35: #{tpu_custom_call.1} parent=11 // pred_region
          _
        $region36: #{tpu_custom_call.1} parent=11 // pred_fallthru
          _
      $region12: #{tpu_custom_call.1} parent=5 // pred_fallthru
        _
      %p308 = scmp.lt.s32.totalorder %s19, 2
      // Predicated region
      $region37: #{tpu_custom_call.1} parent=5 // pred_check
        %p309 = pneg %p308
      $region38: #{tpu_custom_call.1} parent=5 // pred_check_branch
        %311 = sbr.rel (%p309) target = $region40
      $region39: #{tpu_custom_call.1} parent=5 // pred_region
        // Predicated region
        $region41: #{tpu_custom_call.1} parent=39 // pred_check
          %p312 = pneg %p39
        $region42: #{tpu_custom_call.1} parent=39 // pred_check_branch
          %314 = sbr.rel (%p312) target = $region44
        $region43: #{tpu_custom_call.1} parent=39 // pred_region
          %p315 = scmp.lt.s32.totalorder %s19, 1
          %s316 = scalar_select %p315, %s19, 1
          %s317 = scalar_lea.vmem %s0, %s316
        $region44: #{tpu_custom_call.1} parent=39 // pred_fallthru
          _
        // Predicated region
        $region45: #{tpu_custom_call.1} parent=39 // pred_check
          %p318 = pneg %p65
        $region46: #{tpu_custom_call.1} parent=39 // pred_check_branch
          %320 = sbr.rel (%p318) target = $region48
        $region47: #{tpu_custom_call.1} parent=39 // pred_region
          %p321 = scmp.lt.s32.totalorder %s19, 1
          %s322 = scalar_select %p321, %s19, 1
          %s323 = scalar_lea.vmem %s1, %s322
        $region48: #{tpu_custom_call.1} parent=39 // pred_fallthru
          _
        // Predicated region
        $region49: #{tpu_custom_call.1} parent=39 // pred_check
          %p324 = pneg %p91
        $region50: #{tpu_custom_call.1} parent=39 // pred_check_branch
          %326 = sbr.rel (%p324) target = $region52
        $region51: #{tpu_custom_call.1} parent=39 // pred_region
          %p327 = scmp.lt.s32.totalorder %s19, 1
          %s328 = scalar_select %p327, %s19, 1
          %s329 = scalar_lea.vmem %s2, %s328
        $region52: #{tpu_custom_call.1} parent=39 // pred_fallthru
          _
        // Predicated region
        $region53: #{tpu_custom_call.1} parent=39 // pred_check
          %p330 = pneg %p117
        $region54: #{tpu_custom_call.1} parent=39 // pred_check_branch
          %332 = sbr.rel (%p330) target = $region56
        $region55: #{tpu_custom_call.1} parent=39 // pred_region
          %p333 = scmp.lt.s32.totalorder %s19, 1
          %s334 = scalar_select %p333, %s19, 1
          %s335 = scalar_lea.vmem %s3, %s334
        $region56: #{tpu_custom_call.1} parent=39 // pred_fallthru
          _
      $region40: #{tpu_custom_call.1} parent=5 // pred_fallthru
        _
      %p336 = scmp.le.s32.totalorder 1, %s19
      %p337 = scmp.lt.s32.totalorder %s19, 3
      %p338 = pnand %p336, %p337
      %p339 = pneg %p338
      // Predicated region
      $region57: #{tpu_custom_call.1} parent=5 // pred_check
        _
      $region58: #{tpu_custom_call.1} parent=5 // pred_check_branch
        %341 = sbr.rel (%p338) target = $region60
      $region59: #{tpu_custom_call.1} parent=5 // pred_region
        %s342 = ssub.s32 %s19, 1
        %p343 = scmp.lt.s32.totalorder %s24, 1
        %s344 = scalar_select %p343, %s24, 1
        %s345 = scalar_lea.vmem %s0, %s344
        %p346 = pneg %p45
        %p347 = pneg %p42
        %p348 = scmp.lt.s32.totalorder %s24, 1
        %s349 = scalar_select %p348, %s24, 1
        %s350 = scalar_lea.vmem %s1, %s349
        %p351 = pneg %p71
        %p352 = pneg %p68
        %p353 = scmp.lt.s32.totalorder %s24, 1
        %s354 = scalar_select %p353, %s24, 1
        %s355 = scalar_lea.vmem %s2, %s354
        %p356 = pneg %p97
        %p357 = pneg %p94
        %p358 = scmp.lt.s32.totalorder %s24, 1
        %s359 = scalar_select %p358, %s24, 1
        %s360 = scalar_lea.vmem %s3, %s359
        %p361 = pneg %p123
        %p362 = pneg %p120
        %p363 = pneg %p144
        %p364 = pneg %p141
        %p365 = pneg %p165
        %p366 = pneg %p162
        %p367 = pneg %p186
        %p368 = pneg %p183
        %p369 = pneg %p207
        %p370 = pneg %p204
        %p371 = pneg %p228
        %p372 = pneg %p225
        %p373 = pneg %p249
        %p374 = pneg %p246
        %p375 = pneg %p275
        %p376 = pneg %p272
        %s377 = sand.u32 %s262, 1
        %s378 = scalar_lea.sflag [#allocation3], %s377
        %s379 = sand.u32 %s262, 1
        %s380 = smul.addr %s379, 4
        %s381 = scalar_lea.vmem [#allocation2], %s380
        %p382 = scmp.lt.s32.totalorder %s24, 1
        %s383 = scalar_select %p382, %s24, 1
        %s384 = scalar_lea.vmem %s0, %s383
        %p385 = scmp.lt.s32.totalorder %s24, 1
        %s386 = scalar_select %p385, %s24, 1
        %s387 = scalar_lea.vmem %s1, %s386
        %p388 = scmp.lt.s32.totalorder %s24, 1
        %s389 = scalar_select %p388, %s24, 1
        %s390 = scalar_lea.vmem %s2, %s389
        %p391 = scmp.lt.s32.totalorder %s24, 1
        %s392 = scalar_select %p391, %s24, 1
        %s393 = scalar_lea.vmem %s3, %s392
        %v394 = vld [vmem:[%s4] sm:$0xff]
        %v395 = vld [vmem:[%s4 + $0x8] sm:$0xff]
        %v396 = vld [vmem:[%s4 + $0x10] sm:$0xff]
        %v397 = vld [vmem:[%s4 + $0x18] sm:$0xff]
        %v398 = vld [vmem:[%s4 + $0x20] sm:$0xff]
        %v399 = vld [vmem:[%s4 + $0x28] sm:$0xff]
        %v400 = vld [vmem:[%s4 + $0x30] sm:$0x3]
        %v401 = vld [vmem:[%s5] sm:$0xff]
        %v402 = vld [vmem:[%s5 + $0x8] sm:$0xff]
        %v403 = vld [vmem:[%s5 + $0x10] sm:$0xff]
        %v404 = vld [vmem:[%s5 + $0x18] sm:$0xff]
        %v405 = vld [vmem:[%s5 + $0x20] sm:$0xff]
        %v406 = vld [vmem:[%s5 + $0x28] sm:$0xff]
        %v407 = vld [vmem:[%s5 + $0x30] sm:$0x3]
        %v408 = vld [vmem:[%s6] sm:$0xff]
        %v409 = vld [vmem:[%s6 + $0x8] sm:$0xff]
        %v410 = vld [vmem:[%s6 + $0x10] sm:$0xff]
        %v411 = vld [vmem:[%s6 + $0x18] sm:$0xff]
        %v412 = vld [vmem:[%s6 + $0x20] sm:$0xff]
        %v413 = vld [vmem:[%s6 + $0x28] sm:$0xff]
        %v414 = vld [vmem:[%s6 + $0x30] sm:$0x3]
        %s415 = scalar_lea.vmem %s6, 56
        %v416 = vld [vmem:[%s415] sm:$0xff]
        %v417 = vld [vmem:[%s415 + $0x8] sm:$0xff]
        %v418 = vld [vmem:[%s415 + $0x10] sm:$0xff]
        %v419 = vld [vmem:[%s415 + $0x18] sm:$0xff]
        %v420 = vld [vmem:[%s415 + $0x20] sm:$0xff]
        %v421 = vld [vmem:[%s415 + $0x28] sm:$0xff]
        %v422 = vld [vmem:[%s415 + $0x30] sm:$0x3]
        %s423 = scalar_lea.vmem %s6, 112
        %v424 = vld [vmem:[%s423] sm:$0xff]
        %v425 = vld [vmem:[%s423 + $0x8] sm:$0xff]
        %v426 = vld [vmem:[%s423 + $0x10] sm:$0xff]
        %v427 = vld [vmem:[%s423 + $0x18] sm:$0xff]
        %v428 = vld [vmem:[%s423 + $0x20] sm:$0xff]
        %v429 = vld [vmem:[%s423 + $0x28] sm:$0xff]
        %v430 = vld [vmem:[%s423 + $0x30] sm:$0x3]
        %s431 = scalar_lea.vmem %s6, 168
        %v432 = vld [vmem:[%s431] sm:$0xff]
        %v433 = vld [vmem:[%s431 + $0x8] sm:$0xff]
        %v434 = vld [vmem:[%s431 + $0x10] sm:$0xff]
        %v435 = vld [vmem:[%s431 + $0x18] sm:$0xff]
        %v436 = vld [vmem:[%s431 + $0x20] sm:$0xff]
        %v437 = vld [vmem:[%s431 + $0x28] sm:$0xff]
        %v438 = vld [vmem:[%s431 + $0x30] sm:$0x3]
        %v439 = vld [vmem:[%s7] sm:$0xff]
        %v440 = vld [vmem:[%s7 + $0x8] sm:$0xff]
        %v441 = vld [vmem:[%s7 + $0x10] sm:$0xff]
        %v442 = vld [vmem:[%s7 + $0x18] sm:$0xff]
        %v443 = vld [vmem:[%s7 + $0x20] sm:$0xff]
        %v444 = vld [vmem:[%s7 + $0x28] sm:$0xff]
        %v445 = vld [vmem:[%s7 + $0x30] sm:$0x3]
        %s446 = scalar_lea.vmem %s7, 56
        %v447 = vld [vmem:[%s446] sm:$0xff]
        %v448 = vld [vmem:[%s446 + $0x8] sm:$0xff]
        %v449 = vld [vmem:[%s446 + $0x10] sm:$0xff]
        %v450 = vld [vmem:[%s446 + $0x18] sm:$0xff]
        %v451 = vld [vmem:[%s446 + $0x20] sm:$0xff]
        %v452 = vld [vmem:[%s446 + $0x28] sm:$0xff]
        %v453 = vld [vmem:[%s446 + $0x30] sm:$0x3]
        %s454 = scalar_lea.vmem %s7, 112
        %v455 = vld [vmem:[%s454] sm:$0xff]
        %v456 = vld [vmem:[%s454 + $0x8] sm:$0xff]
        %v457 = vld [vmem:[%s454 + $0x10] sm:$0xff]
        %v458 = vld [vmem:[%s454 + $0x18] sm:$0xff]
        %v459 = vld [vmem:[%s454 + $0x20] sm:$0xff]
        %v460 = vld [vmem:[%s454 + $0x28] sm:$0xff]
        %v461 = vld [vmem:[%s454 + $0x30] sm:$0x3]
        %s462 = scalar_lea.vmem %s7, 168
        %v463 = vld [vmem:[%s462] sm:$0xff]
        %v464 = vld [vmem:[%s462 + $0x8] sm:$0xff]
        %v465 = vld [vmem:[%s462 + $0x10] sm:$0xff]
        %v466 = vld [vmem:[%s462 + $0x18] sm:$0xff]
        %v467 = vld [vmem:[%s462 + $0x20] sm:$0xff]
        %v468 = vld [vmem:[%s462 + $0x28] sm:$0xff]
        %v469 = vld [vmem:[%s462 + $0x30] sm:$0x3]
        %v470 = vld [vmem:[%s8] sm:$0xf]
        %v471 = vld [vmem:[%s9] sm:$0xf]
        %v472 = vld [vmem:[%s384] sm:$0x1]
        %474 = vset.pattern.permute.xlu0 0
        %475 = vperm.xlu0 %474, %v394
        %v476 = vpop.permute.xlu0 %475
        %479 = vset.pattern.permute.xlu0 0
        %480 = vperm.xlu0 %479, %v395
        %v481 = vpop.permute.xlu0 %480
        %484 = vset.pattern.permute.xlu0 0
        %485 = vperm.xlu0 %484, %v396
        %v486 = vpop.permute.xlu0 %485
        %489 = vset.pattern.permute.xlu0 0
        %490 = vperm.xlu0 %489, %v397
        %v491 = vpop.permute.xlu0 %490
        %494 = vset.pattern.permute.xlu0 0
        %495 = vperm.xlu0 %494, %v398
        %v496 = vpop.permute.xlu0 %495
        %499 = vset.pattern.permute.xlu0 0
        %500 = vperm.xlu0 %499, %v399
        %v501 = vpop.permute.xlu0 %500
        %504 = vset.pattern.permute.xlu0 0
        %505 = vperm.xlu0 %504, %v400
        %v506 = vpop.permute.xlu0 %505
        %v509 = vperm.slane %v472, 0
        %v511 = vmul.f32 %v476, %v509
        %v512 = vmul.f32 %v481, %v509
        %v513 = vmul.f32 %v486, %v509
        %v514 = vmul.f32 %v491, %v509
        %v515 = vmul.f32 %v496, %v509
        %v516 = vmul.f32 %v501, %v509
        %v517 = vmul.f32 %v506, %v509
        %v518 = vld [vmem:[%s387] sm:$0x1]
        %519 = vset.pattern.permute.xlu0 1
        %520 = vperm.xlu0 %519, %v394
        %v521 = vpop.permute.xlu0 %520
        %523 = vset.pattern.permute.xlu0 1
        %524 = vperm.xlu0 %523, %v395
        %v525 = vpop.permute.xlu0 %524
        %527 = vset.pattern.permute.xlu0 1
        %528 = vperm.xlu0 %527, %v396
        %v529 = vpop.permute.xlu0 %528
        %531 = vset.pattern.permute.xlu0 1
        %532 = vperm.xlu0 %531, %v397
        %v533 = vpop.permute.xlu0 %532
        %535 = vset.pattern.permute.xlu0 1
        %536 = vperm.xlu0 %535, %v398
        %v537 = vpop.permute.xlu0 %536
        %539 = vset.pattern.permute.xlu0 1
        %540 = vperm.xlu0 %539, %v399
        %v541 = vpop.permute.xlu0 %540
        %543 = vset.pattern.permute.xlu0 1
        %544 = vperm.xlu0 %543, %v400
        %v545 = vpop.permute.xlu0 %544
        %v548 = vperm.slane %v518, 0
        %v550 = vmul.f32 %v521, %v548
        %v551 = vmul.f32 %v525, %v548
        %v552 = vmul.f32 %v529, %v548
        %v553 = vmul.f32 %v533, %v548
        %v554 = vmul.f32 %v537, %v548
        %v555 = vmul.f32 %v541, %v548
        %v556 = vmul.f32 %v545, %v548
        %v557 = vadd.f32 %v511, %v550
        %v558 = vadd.f32 %v512, %v551
        %v559 = vadd.f32 %v513, %v552
        %v560 = vadd.f32 %v514, %v553
        %v561 = vadd.f32 %v515, %v554
        %v562 = vadd.f32 %v516, %v555
        %v563 = vadd.f32 %v517, %v556
        %v564 = vld [vmem:[%s390] sm:$0x1]
        %565 = vset.pattern.permute.xlu0 2
        %566 = vperm.xlu0 %565, %v394
        %v567 = vpop.permute.xlu0 %566
        %569 = vset.pattern.permute.xlu0 2
        %570 = vperm.xlu0 %569, %v395
        %v571 = vpop.permute.xlu0 %570
        %573 = vset.pattern.permute.xlu0 2
        %574 = vperm.xlu0 %573, %v396
        %v575 = vpop.permute.xlu0 %574
        %577 = vset.pattern.permute.xlu0 2
        %578 = vperm.xlu0 %577, %v397
        %v579 = vpop.permute.xlu0 %578
        %581 = vset.pattern.permute.xlu0 2
        %582 = vperm.xlu0 %581, %v398
        %v583 = vpop.permute.xlu0 %582
        %585 = vset.pattern.permute.xlu0 2
        %586 = vperm.xlu0 %585, %v399
        %v587 = vpop.permute.xlu0 %586
        %589 = vset.pattern.permute.xlu0 2
        %590 = vperm.xlu0 %589, %v400
        %v591 = vpop.permute.xlu0 %590
        %v594 = vperm.slane %v564, 0
        %v596 = vmul.f32 %v567, %v594
        %v597 = vmul.f32 %v571, %v594
        %v598 = vmul.f32 %v575, %v594
        %v599 = vmul.f32 %v579, %v594
        %v600 = vmul.f32 %v583, %v594
        %v601 = vmul.f32 %v587, %v594
        %v602 = vmul.f32 %v591, %v594
        %v603 = vadd.f32 %v557, %v596
        %v604 = vadd.f32 %v558, %v597
        %v605 = vadd.f32 %v559, %v598
        %v606 = vadd.f32 %v560, %v599
        %v607 = vadd.f32 %v561, %v600
        %v608 = vadd.f32 %v562, %v601
        %v609 = vadd.f32 %v563, %v602
        %v610 = vld [vmem:[%s393] sm:$0x1]
        %611 = vset.pattern.permute.xlu0 3
        %612 = vperm.xlu0 %611, %v394
        %v613 = vpop.permute.xlu0 %612
        %615 = vset.pattern.permute.xlu0 3
        %616 = vperm.xlu0 %615, %v395
        %v617 = vpop.permute.xlu0 %616
        %619 = vset.pattern.permute.xlu0 3
        %620 = vperm.xlu0 %619, %v396
        %v621 = vpop.permute.xlu0 %620
        %623 = vset.pattern.permute.xlu0 3
        %624 = vperm.xlu0 %623, %v397
        %v625 = vpop.permute.xlu0 %624
        %627 = vset.pattern.permute.xlu0 3
        %628 = vperm.xlu0 %627, %v398
        %v629 = vpop.permute.xlu0 %628
        %631 = vset.pattern.permute.xlu0 3
        %632 = vperm.xlu0 %631, %v399
        %v633 = vpop.permute.xlu0 %632
        %635 = vset.pattern.permute.xlu0 3
        %636 = vperm.xlu0 %635, %v400
        %v637 = vpop.permute.xlu0 %636
        %v640 = vperm.slane %v610, 0
        %v642 = vmul.f32 %v613, %v640
        %v643 = vmul.f32 %v617, %v640
        %v644 = vmul.f32 %v621, %v640
        %v645 = vmul.f32 %v625, %v640
        %v646 = vmul.f32 %v629, %v640
        %v647 = vmul.f32 %v633, %v640
        %v648 = vmul.f32 %v637, %v640
        %v649 = vadd.f32 %v603, %v642
        %v650 = vadd.f32 %v604, %v643
        %v651 = vadd.f32 %v605, %v644
        %v652 = vadd.f32 %v606, %v645
        %v653 = vadd.f32 %v607, %v646
        %v654 = vadd.f32 %v608, %v647
        %v655 = vadd.f32 %v609, %v648
        %657 = vset.pattern.permute.xlu0 0
        %658 = vperm.xlu0 %657, %v401
        %v659 = vpop.permute.xlu0 %658
        %662 = vset.pattern.permute.xlu0 0
        %663 = vperm.xlu0 %662, %v402
        %v664 = vpop.permute.xlu0 %663
        %667 = vset.pattern.permute.xlu0 0
        %668 = vperm.xlu0 %667, %v403
        %v669 = vpop.permute.xlu0 %668
        %672 = vset.pattern.permute.xlu0 0
        %673 = vperm.xlu0 %672, %v404
        %v674 = vpop.permute.xlu0 %673
        %677 = vset.pattern.permute.xlu0 0
        %678 = vperm.xlu0 %677, %v405
        %v679 = vpop.permute.xlu0 %678
        %682 = vset.pattern.permute.xlu0 0
        %683 = vperm.xlu0 %682, %v406
        %v684 = vpop.permute.xlu0 %683
        %687 = vset.pattern.permute.xlu0 0
        %688 = vperm.xlu0 %687, %v407
        %v689 = vpop.permute.xlu0 %688
        %v691 = vadd.f32 %v649, %v659
        %v692 = vadd.f32 %v650, %v664
        %v693 = vadd.f32 %v651, %v669
        %v694 = vadd.f32 %v652, %v674
        %v695 = vadd.f32 %v653, %v679
        %v696 = vadd.f32 %v654, %v684
        %v697 = vadd.f32 %v655, %v689
        %v698 = vtanh.pop %v691
        %v699 = vtanh.pop %v692
        %v700 = vtanh.pop %v693
        %v701 = vtanh.pop %v694
        %v702 = vtanh.pop %v695
        %v703 = vtanh.pop %v696
        %v704 = vtanh.pop %v697
        %706 = vset.pattern.permute.xlu0 0
        %707 = vperm.xlu0 %706, %v439
        %v708 = vpop.permute.xlu0 %707
        %711 = vset.pattern.permute.xlu0 0
        %712 = vperm.xlu0 %711, %v440
        %v713 = vpop.permute.xlu0 %712
        %716 = vset.pattern.permute.xlu0 0
        %717 = vperm.xlu0 %716, %v441
        %v718 = vpop.permute.xlu0 %717
        %721 = vset.pattern.permute.xlu0 0
        %722 = vperm.xlu0 %721, %v442
        %v723 = vpop.permute.xlu0 %722
        %726 = vset.pattern.permute.xlu0 0
        %727 = vperm.xlu0 %726, %v443
        %v728 = vpop.permute.xlu0 %727
        %731 = vset.pattern.permute.xlu0 0
        %732 = vperm.xlu0 %731, %v444
        %v733 = vpop.permute.xlu0 %732
        %736 = vset.pattern.permute.xlu0 0
        %737 = vperm.xlu0 %736, %v445
        %v738 = vpop.permute.xlu0 %737
        %vm740 = vcmask 408576
        %v742 = vsel %vm740, %v408, 0
        %v745 = vsel %vm740, %v409, 0
        %v748 = vsel %vm740, %v410, 0
        %v751 = vsel %vm740, %v411, 0
        %v754 = vsel %vm740, %v412, 0
        %v757 = vsel %vm740, %v413, 0
        %v760 = vsel %vm740, %v414, 0
        %vm762 = vcmask 1041408
        %v764 = vsel %vm762, %v704, 0
        %766 = vmatpush.msra.mxu0 0.0
        %767 = vmatpush.msra.mxu0 0.0
        %768 = vmatpush.msra.mxu0 0.0
        %769 = vmatpush.msra.mxu0 0.0
        %770 = vmatpush.msra.mxu0 0.0
        %771 = vmatpush.msra.mxu0 0.0
        %772 = vmatpush.msra.mxu0 0.0
        %773 = vmatpush.msra.mxu0 0.0
        %774 = vmatpush.msra.mxu0 0.0
        %v775 = vand.u32 %v764, 4294901760
        %776 = vmatpush.msra.mxu0 %v775
        %v777 = vand.u32 %v703, 4294901760
        %778 = vmatpush.msra.mxu0 %v777
        %v779 = vand.u32 %v702, 4294901760
        %780 = vmatpush.msra.mxu0 %v779
        %v781 = vand.u32 %v701, 4294901760
        %782 = vmatpush.msra.mxu0 %v781
        %v783 = vand.u32 %v700, 4294901760
        %784 = vmatpush.msra.mxu0 %v783
        %v785 = vand.u32 %v699, 4294901760
        %786 = vmatpush.msra.mxu0 %v785
        %v787 = vand.u32 %v698, 4294901760
        %788 = vmatpush.msra.mxu0 %v787
        %v789 = vand.u32 %v742, 4294901760
        %v790 = vsub.f32 %v742, %v789
        %v791 = vand.u32 %v790, 4294901760
        %v792 = vsub.f32 %v790, %v791
        %v793 = vand.u32 %v792, 4294901760
        %794 = vmatmul.f32.gmra.mxu0 %v793
        %v795 = vpop.f32.mrf.mxu0
        %v796 = vadd.f32 %v708, %v795
        %v797 = vand.u32 %v745, 4294901760
        %v798 = vsub.f32 %v745, %v797
        %v799 = vand.u32 %v798, 4294901760
        %v800 = vsub.f32 %v798, %v799
        %v801 = vand.u32 %v800, 4294901760
        %802 = vmatmul.f32.gmra.mxu0 %v801
        %v803 = vpop.f32.mrf.mxu0
        %v804 = vadd.f32 %v713, %v803
        %v805 = vand.u32 %v748, 4294901760
        %v806 = vsub.f32 %v748, %v805
        %v807 = vand.u32 %v806, 4294901760
        %v808 = vsub.f32 %v806, %v807
        %v809 = vand.u32 %v808, 4294901760
        %810 = vmatmul.f32.gmra.mxu0 %v809
        %v811 = vpop.f32.mrf.mxu0
        %v812 = vadd.f32 %v718, %v811
        %v813 = vand.u32 %v751, 4294901760
        %v814 = vsub.f32 %v751, %v813
        %v815 = vand.u32 %v814, 4294901760
        %v816 = vsub.f32 %v814, %v815
        %v817 = vand.u32 %v816, 4294901760
        %818 = vmatmul.f32.gmra.mxu0 %v817
        %v819 = vpop.f32.mrf.mxu0
        %v820 = vadd.f32 %v723, %v819
        %v821 = vand.u32 %v754, 4294901760
        %v822 = vsub.f32 %v754, %v821
        %v823 = vand.u32 %v822, 4294901760
        %v824 = vsub.f32 %v822, %v823
        %v825 = vand.u32 %v824, 4294901760
        %826 = vmatmul.f32.gmra.mxu0 %v825
        %v827 = vpop.f32.mrf.mxu0
        %v828 = vadd.f32 %v728, %v827
        %v829 = vand.u32 %v757, 4294901760
        %v830 = vsub.f32 %v757, %v829
        %v831 = vand.u32 %v830, 4294901760
        %v832 = vsub.f32 %v830, %v831
        %v833 = vand.u32 %v832, 4294901760
        %834 = vmatmul.f32.gmra.mxu0 %v833
        %v835 = vpop.f32.mrf.mxu0
        %v836 = vadd.f32 %v733, %v835
        %v837 = vand.u32 %v760, 4294901760
        %v838 = vsub.f32 %v760, %v837
        %v839 = vand.u32 %v838, 4294901760
        %v840 = vsub.f32 %v838, %v839
        %v841 = vand.u32 %v840, 4294901760
        %842 = vmatmul.f32.gmra.mxu0 %v841
        %v843 = vpop.f32.mrf.mxu0
        %v844 = vadd.f32 %v738, %v843
        %845 = vdwg.mxu0
        %846 = vmatpush.msra.mxu0 0.0
        %847 = vmatpush.msra.mxu0 0.0
        %848 = vmatpush.msra.mxu0 0.0
        %849 = vmatpush.msra.mxu0 0.0
        %850 = vmatpush.msra.mxu0 0.0
        %851 = vmatpush.msra.mxu0 0.0
        %852 = vmatpush.msra.mxu0 0.0
        %853 = vmatpush.msra.mxu0 0.0
        %854 = vmatpush.msra.mxu0 0.0
        %v855 = vand.u32 %v764, 4294901760
        %v856 = vsub.f32 %v764, %v855
        %v857 = vand.u32 %v856, 4294901760
        %v858 = vsub.f32 %v856, %v857
        %v859 = vand.u32 %v858, 4294901760
        %860 = vmatpush.msra.mxu0 %v859
        %v861 = vand.u32 %v703, 4294901760
        %v862 = vsub.f32 %v703, %v861
        %v863 = vand.u32 %v862, 4294901760
        %v864 = vsub.f32 %v862, %v863
        %v865 = vand.u32 %v864, 4294901760
        %866 = vmatpush.msra.mxu0 %v865
        %v867 = vand.u32 %v702, 4294901760
        %v868 = vsub.f32 %v702, %v867
        %v869 = vand.u32 %v868, 4294901760
        %v870 = vsub.f32 %v868, %v869
        %v871 = vand.u32 %v870, 4294901760
        %872 = vmatpush.msra.mxu0 %v871
        %v873 = vand.u32 %v701, 4294901760
        %v874 = vsub.f32 %v701, %v873
        %v875 = vand.u32 %v874, 4294901760
        %v876 = vsub.f32 %v874, %v875
        %v877 = vand.u32 %v876, 4294901760
        %878 = vmatpush.msra.mxu0 %v877
        %v879 = vand.u32 %v700, 4294901760
        %v880 = vsub.f32 %v700, %v879
        %v881 = vand.u32 %v880, 4294901760
        %v882 = vsub.f32 %v880, %v881
        %v883 = vand.u32 %v882, 4294901760
        %884 = vmatpush.msra.mxu0 %v883
        %v885 = vand.u32 %v699, 4294901760
        %v886 = vsub.f32 %v699, %v885
        %v887 = vand.u32 %v886, 4294901760
        %v888 = vsub.f32 %v886, %v887
        %v889 = vand.u32 %v888, 4294901760
        %890 = vmatpush.msra.mxu0 %v889
        %v891 = vand.u32 %v698, 4294901760
        %v892 = vsub.f32 %v698, %v891
        %v893 = vand.u32 %v892, 4294901760
        %v894 = vsub.f32 %v892, %v893
        %v895 = vand.u32 %v894, 4294901760
        %896 = vmatpush.msra.mxu0 %v895
        %v897 = vand.u32 %v742, 4294901760
        %898 = vmatmul.f32.gmra.mxu0 %v897
        %v899 = vpop.f32.mrf.mxu0
        %v900 = vadd.f32 %v796, %v899
        %v901 = vand.u32 %v745, 4294901760
        %902 = vmatmul.f32.gmra.mxu0 %v901
        %v903 = vpop.f32.mrf.mxu0
        %v904 = vadd.f32 %v804, %v903
        %v905 = vand.u32 %v748, 4294901760
        %906 = vmatmul.f32.gmra.mxu0 %v905
        %v907 = vpop.f32.mrf.mxu0
        %v908 = vadd.f32 %v812, %v907
        %v909 = vand.u32 %v751, 4294901760
        %910 = vmatmul.f32.gmra.mxu0 %v909
        %v911 = vpop.f32.mrf.mxu0
        %v912 = vadd.f32 %v820, %v911
        %v913 = vand.u32 %v754, 4294901760
        %914 = vmatmul.f32.gmra.mxu0 %v913
        %v915 = vpop.f32.mrf.mxu0
        %v916 = vadd.f32 %v828, %v915
        %v917 = vand.u32 %v757, 4294901760
        %918 = vmatmul.f32.gmra.mxu0 %v917
        %v919 = vpop.f32.mrf.mxu0
        %v920 = vadd.f32 %v836, %v919
        %v921 = vand.u32 %v760, 4294901760
        %922 = vmatmul.f32.gmra.mxu0 %v921
        %v923 = vpop.f32.mrf.mxu0
        %v924 = vadd.f32 %v844, %v923
        %925 = vdwg.mxu0
        %926 = vmatpush.msra.mxu0 0.0
        %927 = vmatpush.msra.mxu0 0.0
        %928 = vmatpush.msra.mxu0 0.0
        %929 = vmatpush.msra.mxu0 0.0
        %930 = vmatpush.msra.mxu0 0.0
        %931 = vmatpush.msra.mxu0 0.0
        %932 = vmatpush.msra.mxu0 0.0
        %933 = vmatpush.msra.mxu0 0.0
        %934 = vmatpush.msra.mxu0 0.0
        %v935 = vand.u32 %v764, 4294901760
        %v936 = vsub.f32 %v764, %v935
        %937 = vmatpush.msra.mxu0 %v936
        %v938 = vand.u32 %v703, 4294901760
        %v939 = vsub.f32 %v703, %v938
        %940 = vmatpush.msra.mxu0 %v939
        %v941 = vand.u32 %v702, 4294901760
        %v942 = vsub.f32 %v702, %v941
        %943 = vmatpush.msra.mxu0 %v942
        %v944 = vand.u32 %v701, 4294901760
        %v945 = vsub.f32 %v701, %v944
        %946 = vmatpush.msra.mxu0 %v945
        %v947 = vand.u32 %v700, 4294901760
        %v948 = vsub.f32 %v700, %v947
        %949 = vmatpush.msra.mxu0 %v948
        %v950 = vand.u32 %v699, 4294901760
        %v951 = vsub.f32 %v699, %v950
        %952 = vmatpush.msra.mxu0 %v951
        %v953 = vand.u32 %v698, 4294901760
        %v954 = vsub.f32 %v698, %v953
        %955 = vmatpush.msra.mxu0 %v954
        %v956 = vand.u32 %v742, 4294901760
        %v957 = vsub.f32 %v742, %v956
        %958 = vmatmul.f32.gmra.mxu0 %v957
        %v959 = vpop.f32.mrf.mxu0
        %v960 = vadd.f32 %v900, %v959
        %v961 = vand.u32 %v745, 4294901760
        %v962 = vsub.f32 %v745, %v961
        %963 = vmatmul.f32.gmra.mxu0 %v962
        %v964 = vpop.f32.mrf.mxu0
        %v965 = vadd.f32 %v904, %v964
        %v966 = vand.u32 %v748, 4294901760
        %v967 = vsub.f32 %v748, %v966
        %968 = vmatmul.f32.gmra.mxu0 %v967
        %v969 = vpop.f32.mrf.mxu0
        %v970 = vadd.f32 %v908, %v969
        %v971 = vand.u32 %v751, 4294901760
        %v972 = vsub.f32 %v751, %v971
        %973 = vmatmul.f32.gmra.mxu0 %v972
        %v974 = vpop.f32.mrf.mxu0
        %v975 = vadd.f32 %v912, %v974
        %v976 = vand.u32 %v754, 4294901760
        %v977 = vsub.f32 %v754, %v976
        %978 = vmatmul.f32.gmra.mxu0 %v977
        %v979 = vpop.f32.mrf.mxu0
        %v980 = vadd.f32 %v916, %v979
        %v981 = vand.u32 %v757, 4294901760
        %v982 = vsub.f32 %v757, %v981
        %983 = vmatmul.f32.gmra.mxu0 %v982
        %v984 = vpop.f32.mrf.mxu0
        %v985 = vadd.f32 %v920, %v984
        %v986 = vand.u32 %v760, 4294901760
        %v987 = vsub.f32 %v760, %v986
        %988 = vmatmul.f32.gmra.mxu0 %v987
        %v989 = vpop.f32.mrf.mxu0
        %v990 = vadd.f32 %v924, %v989
        %991 = vdwg.mxu0
        %992 = vmatpush.msra.mxu0 0.0
        %993 = vmatpush.msra.mxu0 0.0
        %994 = vmatpush.msra.mxu0 0.0
        %995 = vmatpush.msra.mxu0 0.0
        %996 = vmatpush.msra.mxu0 0.0
        %997 = vmatpush.msra.mxu0 0.0
        %998 = vmatpush.msra.mxu0 0.0
        %999 = vmatpush.msra.mxu0 0.0
        %1000 = vmatpush.msra.mxu0 0.0
        %v1001 = vand.u32 %v764, 4294901760
        %1002 = vmatpush.msra.mxu0 %v1001
        %v1003 = vand.u32 %v703, 4294901760
        %1004 = vmatpush.msra.mxu0 %v1003
        %v1005 = vand.u32 %v702, 4294901760
        %1006 = vmatpush.msra.mxu0 %v1005
        %v1007 = vand.u32 %v701, 4294901760
        %1008 = vmatpush.msra.mxu0 %v1007
        %v1009 = vand.u32 %v700, 4294901760
        %1010 = vmatpush.msra.mxu0 %v1009
        %v1011 = vand.u32 %v699, 4294901760
        %1012 = vmatpush.msra.mxu0 %v1011
        %v1013 = vand.u32 %v698, 4294901760
        %1014 = vmatpush.msra.mxu0 %v1013
        %v1015 = vand.u32 %v742, 4294901760
        %v1016 = vsub.f32 %v742, %v1015
        %v1017 = vand.u32 %v1016, 4294901760
        %1018 = vmatmul.f32.gmra.mxu0 %v1017
        %v1019 = vpop.f32.mrf.mxu0
        %v1020 = vadd.f32 %v960, %v1019
        %v1021 = vand.u32 %v745, 4294901760
        %v1022 = vsub.f32 %v745, %v1021
        %v1023 = vand.u32 %v1022, 4294901760
        %1024 = vmatmul.f32.gmra.mxu0 %v1023
        %v1025 = vpop.f32.mrf.mxu0
        %v1026 = vadd.f32 %v965, %v1025
        %v1027 = vand.u32 %v748, 4294901760
        %v1028 = vsub.f32 %v748, %v1027
        %v1029 = vand.u32 %v1028, 4294901760
        %1030 = vmatmul.f32.gmra.mxu0 %v1029
        %v1031 = vpop.f32.mrf.mxu0
        %v1032 = vadd.f32 %v970, %v1031
        %v1033 = vand.u32 %v751, 4294901760
        %v1034 = vsub.f32 %v751, %v1033
        %v1035 = vand.u32 %v1034, 4294901760
        %1036 = vmatmul.f32.gmra.mxu0 %v1035
        %v1037 = vpop.f32.mrf.mxu0
        %v1038 = vadd.f32 %v975, %v1037
        %v1039 = vand.u32 %v754, 4294901760
        %v1040 = vsub.f32 %v754, %v1039
        %v1041 = vand.u32 %v1040, 4294901760
        %1042 = vmatmul.f32.gmra.mxu0 %v1041
        %v1043 = vpop.f32.mrf.mxu0
        %v1044 = vadd.f32 %v980, %v1043
        %v1045 = vand.u32 %v757, 4294901760
        %v1046 = vsub.f32 %v757, %v1045
        %v1047 = vand.u32 %v1046, 4294901760
        %1048 = vmatmul.f32.gmra.mxu0 %v1047
        %v1049 = vpop.f32.mrf.mxu0
        %v1050 = vadd.f32 %v985, %v1049
        %v1051 = vand.u32 %v760, 4294901760
        %v1052 = vsub.f32 %v760, %v1051
        %v1053 = vand.u32 %v1052, 4294901760
        %1054 = vmatmul.f32.gmra.mxu0 %v1053
        %v1055 = vpop.f32.mrf.mxu0
        %v1056 = vadd.f32 %v990, %v1055
        %1057 = vdwg.mxu0
        %1058 = vmatpush.msra.mxu0 0.0
        %1059 = vmatpush.msra.mxu0 0.0
        %1060 = vmatpush.msra.mxu0 0.0
        %1061 = vmatpush.msra.mxu0 0.0
        %1062 = vmatpush.msra.mxu0 0.0
        %1063 = vmatpush.msra.mxu0 0.0
        %1064 = vmatpush.msra.mxu0 0.0
        %1065 = vmatpush.msra.mxu0 0.0
        %1066 = vmatpush.msra.mxu0 0.0
        %v1067 = vand.u32 %v764, 4294901760
        %v1068 = vsub.f32 %v764, %v1067
        %v1069 = vand.u32 %v1068, 4294901760
        %1070 = vmatpush.msra.mxu0 %v1069
        %v1071 = vand.u32 %v703, 4294901760
        %v1072 = vsub.f32 %v703, %v1071
        %v1073 = vand.u32 %v1072, 4294901760
        %1074 = vmatpush.msra.mxu0 %v1073
        %v1075 = vand.u32 %v702, 4294901760
        %v1076 = vsub.f32 %v702, %v1075
        %v1077 = vand.u32 %v1076, 4294901760
        %1078 = vmatpush.msra.mxu0 %v1077
        %v1079 = vand.u32 %v701, 4294901760
        %v1080 = vsub.f32 %v701, %v1079
        %v1081 = vand.u32 %v1080, 4294901760
        %1082 = vmatpush.msra.mxu0 %v1081
        %v1083 = vand.u32 %v700, 4294901760
        %v1084 = vsub.f32 %v700, %v1083
        %v1085 = vand.u32 %v1084, 4294901760
        %1086 = vmatpush.msra.mxu0 %v1085
        %v1087 = vand.u32 %v699, 4294901760
        %v1088 = vsub.f32 %v699, %v1087
        %v1089 = vand.u32 %v1088, 4294901760
        %1090 = vmatpush.msra.mxu0 %v1089
        %v1091 = vand.u32 %v698, 4294901760
        %v1092 = vsub.f32 %v698, %v1091
        %v1093 = vand.u32 %v1092, 4294901760
        %1094 = vmatpush.msra.mxu0 %v1093
        %v1095 = vand.u32 %v742, 4294901760
        %1096 = vmatmul.f32.gmra.mxu0 %v1095
        %v1097 = vpop.f32.mrf.mxu0
        %v1098 = vadd.f32 %v1020, %v1097
        %v1099 = vand.u32 %v745, 4294901760
        %1100 = vmatmul.f32.gmra.mxu0 %v1099
        %v1101 = vpop.f32.mrf.mxu0
        %v1102 = vadd.f32 %v1026, %v1101
        %v1103 = vand.u32 %v748, 4294901760
        %1104 = vmatmul.f32.gmra.mxu0 %v1103
        %v1105 = vpop.f32.mrf.mxu0
        %v1106 = vadd.f32 %v1032, %v1105
        %v1107 = vand.u32 %v751, 4294901760
        %1108 = vmatmul.f32.gmra.mxu0 %v1107
        %v1109 = vpop.f32.mrf.mxu0
        %v1110 = vadd.f32 %v1038, %v1109
        %v1111 = vand.u32 %v754, 4294901760
        %1112 = vmatmul.f32.gmra.mxu0 %v1111
        %v1113 = vpop.f32.mrf.mxu0
        %v1114 = vadd.f32 %v1044, %v1113
        %v1115 = vand.u32 %v757, 4294901760
        %1116 = vmatmul.f32.gmra.mxu0 %v1115
        %v1117 = vpop.f32.mrf.mxu0
        %v1118 = vadd.f32 %v1050, %v1117
        %v1119 = vand.u32 %v760, 4294901760
        %1120 = vmatmul.f32.gmra.mxu0 %v1119
        %v1121 = vpop.f32.mrf.mxu0
        %v1122 = vadd.f32 %v1056, %v1121
        %1123 = vdwg.mxu0
        %1124 = vmatpush.msra.mxu0 0.0
        %1125 = vmatpush.msra.mxu0 0.0
        %1126 = vmatpush.msra.mxu0 0.0
        %1127 = vmatpush.msra.mxu0 0.0
        %1128 = vmatpush.msra.mxu0 0.0
        %1129 = vmatpush.msra.mxu0 0.0
        %1130 = vmatpush.msra.mxu0 0.0
        %1131 = vmatpush.msra.mxu0 0.0
        %1132 = vmatpush.msra.mxu0 0.0
        %v1133 = vand.u32 %v764, 4294901760
        %1134 = vmatpush.msra.mxu0 %v1133
        %v1135 = vand.u32 %v703, 4294901760
        %1136 = vmatpush.msra.mxu0 %v1135
        %v1137 = vand.u32 %v702, 4294901760
        %1138 = vmatpush.msra.mxu0 %v1137
        %v1139 = vand.u32 %v701, 4294901760
        %1140 = vmatpush.msra.mxu0 %v1139
        %v1141 = vand.u32 %v700, 4294901760
        %1142 = vmatpush.msra.mxu0 %v1141
        %v1143 = vand.u32 %v699, 4294901760
        %1144 = vmatpush.msra.mxu0 %v1143
        %v1145 = vand.u32 %v698, 4294901760
        %1146 = vmatpush.msra.mxu0 %v1145
        %v1147 = vand.u32 %v742, 4294901760
        %1148 = vmatmul.f32.gmra.mxu0 %v1147
        %v1149 = vpop.f32.mrf.mxu0
        %v1150 = vadd.f32 %v1098, %v1149
        %v1151 = vand.u32 %v745, 4294901760
        %1152 = vmatmul.f32.gmra.mxu0 %v1151
        %v1153 = vpop.f32.mrf.mxu0
        %v1154 = vadd.f32 %v1102, %v1153
        %v1155 = vand.u32 %v748, 4294901760
        %1156 = vmatmul.f32.gmra.mxu0 %v1155
        %v1157 = vpop.f32.mrf.mxu0
        %v1158 = vadd.f32 %v1106, %v1157
        %v1159 = vand.u32 %v751, 4294901760
        %1160 = vmatmul.f32.gmra.mxu0 %v1159
        %v1161 = vpop.f32.mrf.mxu0
        %v1162 = vadd.f32 %v1110, %v1161
        %v1163 = vand.u32 %v754, 4294901760
        %1164 = vmatmul.f32.gmra.mxu0 %v1163
        %v1165 = vpop.f32.mrf.mxu0
        %v1166 = vadd.f32 %v1114, %v1165
        %v1167 = vand.u32 %v757, 4294901760
        %1168 = vmatmul.f32.gmra.mxu0 %v1167
        %v1169 = vpop.f32.mrf.mxu0
        %v1170 = vadd.f32 %v1118, %v1169
        %v1171 = vand.u32 %v760, 4294901760
        %1172 = vmatmul.f32.gmra.mxu0 %v1171
        %v1173 = vpop.f32.mrf.mxu0
        %v1174 = vadd.f32 %v1122, %v1173
        %1175 = vdwg.mxu0
        %v1176 = vtanh.pop %v1150
        %v1177 = vtanh.pop %v1154
        %v1178 = vtanh.pop %v1158
        %v1179 = vtanh.pop %v1162
        %v1180 = vtanh.pop %v1166
        %v1181 = vtanh.pop %v1170
        %v1182 = vtanh.pop %v1174
        %1184 = vset.pattern.permute.xlu0 0
        %1185 = vperm.xlu0 %1184, %v447
        %v1186 = vpop.permute.xlu0 %1185
        %1189 = vset.pattern.permute.xlu0 0
        %1190 = vperm.xlu0 %1189, %v448
        %v1191 = vpop.permute.xlu0 %1190
        %1194 = vset.pattern.permute.xlu0 0
        %1195 = vperm.xlu0 %1194, %v449
        %v1196 = vpop.permute.xlu0 %1195
        %1199 = vset.pattern.permute.xlu0 0
        %1200 = vperm.xlu0 %1199, %v450
        %v1201 = vpop.permute.xlu0 %1200
        %1204 = vset.pattern.permute.xlu0 0
        %1205 = vperm.xlu0 %1204, %v451
        %v1206 = vpop.permute.xlu0 %1205
        %1209 = vset.pattern.permute.xlu0 0
        %1210 = vperm.xlu0 %1209, %v452
        %v1211 = vpop.permute.xlu0 %1210
        %1214 = vset.pattern.permute.xlu0 0
        %1215 = vperm.xlu0 %1214, %v453
        %v1216 = vpop.permute.xlu0 %1215
        %v1219 = vsel %vm740, %v416, 0
        %v1222 = vsel %vm740, %v417, 0
        %v1225 = vsel %vm740, %v418, 0
        %v1228 = vsel %vm740, %v419, 0
        %v1231 = vsel %vm740, %v420, 0
        %v1234 = vsel %vm740, %v421, 0
        %v1237 = vsel %vm740, %v422, 0
        %v1240 = vsel %vm762, %v1182, 0
        %1242 = vmatpush.msra.mxu0 0.0
        %1243 = vmatpush.msra.mxu0 0.0
        %1244 = vmatpush.msra.mxu0 0.0
        %1245 = vmatpush.msra.mxu0 0.0
        %1246 = vmatpush.msra.mxu0 0.0
        %1247 = vmatpush.msra.mxu0 0.0
        %1248 = vmatpush.msra.mxu0 0.0
        %1249 = vmatpush.msra.mxu0 0.0
        %1250 = vmatpush.msra.mxu0 0.0
        %v1251 = vand.u32 %v1240, 4294901760
        %1252 = vmatpush.msra.mxu0 %v1251
        %v1253 = vand.u32 %v1181, 4294901760
        %1254 = vmatpush.msra.mxu0 %v1253
        %v1255 = vand.u32 %v1180, 4294901760
        %1256 = vmatpush.msra.mxu0 %v1255
        %v1257 = vand.u32 %v1179, 4294901760
        %1258 = vmatpush.msra.mxu0 %v1257
        %v1259 = vand.u32 %v1178, 4294901760
        %1260 = vmatpush.msra.mxu0 %v1259
        %v1261 = vand.u32 %v1177, 4294901760
        %1262 = vmatpush.msra.mxu0 %v1261
        %v1263 = vand.u32 %v1176, 4294901760
        %1264 = vmatpush.msra.mxu0 %v1263
        %v1265 = vand.u32 %v1219, 4294901760
        %v1266 = vsub.f32 %v1219, %v1265
        %v1267 = vand.u32 %v1266, 4294901760
        %v1268 = vsub.f32 %v1266, %v1267
        %v1269 = vand.u32 %v1268, 4294901760
        %1270 = vmatmul.f32.gmra.mxu0 %v1269
        %v1271 = vpop.f32.mrf.mxu0
        %v1272 = vadd.f32 %v1186, %v1271
        %v1273 = vand.u32 %v1222, 4294901760
        %v1274 = vsub.f32 %v1222, %v1273
        %v1275 = vand.u32 %v1274, 4294901760
        %v1276 = vsub.f32 %v1274, %v1275
        %v1277 = vand.u32 %v1276, 4294901760
        %1278 = vmatmul.f32.gmra.mxu0 %v1277
        %v1279 = vpop.f32.mrf.mxu0
        %v1280 = vadd.f32 %v1191, %v1279
        %v1281 = vand.u32 %v1225, 4294901760
        %v1282 = vsub.f32 %v1225, %v1281
        %v1283 = vand.u32 %v1282, 4294901760
        %v1284 = vsub.f32 %v1282, %v1283
        %v1285 = vand.u32 %v1284, 4294901760
        %1286 = vmatmul.f32.gmra.mxu0 %v1285
        %v1287 = vpop.f32.mrf.mxu0
        %v1288 = vadd.f32 %v1196, %v1287
        %v1289 = vand.u32 %v1228, 4294901760
        %v1290 = vsub.f32 %v1228, %v1289
        %v1291 = vand.u32 %v1290, 4294901760
        %v1292 = vsub.f32 %v1290, %v1291
        %v1293 = vand.u32 %v1292, 4294901760
        %1294 = vmatmul.f32.gmra.mxu0 %v1293
        %v1295 = vpop.f32.mrf.mxu0
        %v1296 = vadd.f32 %v1201, %v1295
        %v1297 = vand.u32 %v1231, 4294901760
        %v1298 = vsub.f32 %v1231, %v1297
        %v1299 = vand.u32 %v1298, 4294901760
        %v1300 = vsub.f32 %v1298, %v1299
        %v1301 = vand.u32 %v1300, 4294901760
        %1302 = vmatmul.f32.gmra.mxu0 %v1301
        %v1303 = vpop.f32.mrf.mxu0
        %v1304 = vadd.f32 %v1206, %v1303
        %v1305 = vand.u32 %v1234, 4294901760
        %v1306 = vsub.f32 %v1234, %v1305
        %v1307 = vand.u32 %v1306, 4294901760
        %v1308 = vsub.f32 %v1306, %v1307
        %v1309 = vand.u32 %v1308, 4294901760
        %1310 = vmatmul.f32.gmra.mxu0 %v1309
        %v1311 = vpop.f32.mrf.mxu0
        %v1312 = vadd.f32 %v1211, %v1311
        %v1313 = vand.u32 %v1237, 4294901760
        %v1314 = vsub.f32 %v1237, %v1313
        %v1315 = vand.u32 %v1314, 4294901760
        %v1316 = vsub.f32 %v1314, %v1315
        %v1317 = vand.u32 %v1316, 4294901760
        %1318 = vmatmul.f32.gmra.mxu0 %v1317
        %v1319 = vpop.f32.mrf.mxu0
        %v1320 = vadd.f32 %v1216, %v1319
        %1321 = vdwg.mxu0
        %1322 = vmatpush.msra.mxu0 0.0
        %1323 = vmatpush.msra.mxu0 0.0
        %1324 = vmatpush.msra.mxu0 0.0
        %1325 = vmatpush.msra.mxu0 0.0
        %1326 = vmatpush.msra.mxu0 0.0
        %1327 = vmatpush.msra.mxu0 0.0
        %1328 = vmatpush.msra.mxu0 0.0
        %1329 = vmatpush.msra.mxu0 0.0
        %1330 = vmatpush.msra.mxu0 0.0
        %v1331 = vand.u32 %v1240, 4294901760
        %v1332 = vsub.f32 %v1240, %v1331
        %v1333 = vand.u32 %v1332, 4294901760
        %v1334 = vsub.f32 %v1332, %v1333
        %v1335 = vand.u32 %v1334, 4294901760
        %1336 = vmatpush.msra.mxu0 %v1335
        %v1337 = vand.u32 %v1181, 4294901760
        %v1338 = vsub.f32 %v1181, %v1337
        %v1339 = vand.u32 %v1338, 4294901760
        %v1340 = vsub.f32 %v1338, %v1339
        %v1341 = vand.u32 %v1340, 4294901760
        %1342 = vmatpush.msra.mxu0 %v1341
        %v1343 = vand.u32 %v1180, 4294901760
        %v1344 = vsub.f32 %v1180, %v1343
        %v1345 = vand.u32 %v1344, 4294901760
        %v1346 = vsub.f32 %v1344, %v1345
        %v1347 = vand.u32 %v1346, 4294901760
        %1348 = vmatpush.msra.mxu0 %v1347
        %v1349 = vand.u32 %v1179, 4294901760
        %v1350 = vsub.f32 %v1179, %v1349
        %v1351 = vand.u32 %v1350, 4294901760
        %v1352 = vsub.f32 %v1350, %v1351
        %v1353 = vand.u32 %v1352, 4294901760
        %1354 = vmatpush.msra.mxu0 %v1353
        %v1355 = vand.u32 %v1178, 4294901760
        %v1356 = vsub.f32 %v1178, %v1355
        %v1357 = vand.u32 %v1356, 4294901760
        %v1358 = vsub.f32 %v1356, %v1357
        %v1359 = vand.u32 %v1358, 4294901760
        %1360 = vmatpush.msra.mxu0 %v1359
        %v1361 = vand.u32 %v1177, 4294901760
        %v1362 = vsub.f32 %v1177, %v1361
        %v1363 = vand.u32 %v1362, 4294901760
        %v1364 = vsub.f32 %v1362, %v1363
        %v1365 = vand.u32 %v1364, 4294901760
        %1366 = vmatpush.msra.mxu0 %v1365
        %v1367 = vand.u32 %v1176, 4294901760
        %v1368 = vsub.f32 %v1176, %v1367
        %v1369 = vand.u32 %v1368, 4294901760
        %v1370 = vsub.f32 %v1368, %v1369
        %v1371 = vand.u32 %v1370, 4294901760
        %1372 = vmatpush.msra.mxu0 %v1371
        %v1373 = vand.u32 %v1219, 4294901760
        %1374 = vmatmul.f32.gmra.mxu0 %v1373
        %v1375 = vpop.f32.mrf.mxu0
        %v1376 = vadd.f32 %v1272, %v1375
        %v1377 = vand.u32 %v1222, 4294901760
        %1378 = vmatmul.f32.gmra.mxu0 %v1377
        %v1379 = vpop.f32.mrf.mxu0
        %v1380 = vadd.f32 %v1280, %v1379
        %v1381 = vand.u32 %v1225, 4294901760
        %1382 = vmatmul.f32.gmra.mxu0 %v1381
        %v1383 = vpop.f32.mrf.mxu0
        %v1384 = vadd.f32 %v1288, %v1383
        %v1385 = vand.u32 %v1228, 4294901760
        %1386 = vmatmul.f32.gmra.mxu0 %v1385
        %v1387 = vpop.f32.mrf.mxu0
        %v1388 = vadd.f32 %v1296, %v1387
        %v1389 = vand.u32 %v1231, 4294901760
        %1390 = vmatmul.f32.gmra.mxu0 %v1389
        %v1391 = vpop.f32.mrf.mxu0
        %v1392 = vadd.f32 %v1304, %v1391
        %v1393 = vand.u32 %v1234, 4294901760
        %1394 = vmatmul.f32.gmra.mxu0 %v1393
        %v1395 = vpop.f32.mrf.mxu0
        %v1396 = vadd.f32 %v1312, %v1395
        %v1397 = vand.u32 %v1237, 4294901760
        %1398 = vmatmul.f32.gmra.mxu0 %v1397
        %v1399 = vpop.f32.mrf.mxu0
        %v1400 = vadd.f32 %v1320, %v1399
        %1401 = vdwg.mxu0
        %1402 = vmatpush.msra.mxu0 0.0
        %1403 = vmatpush.msra.mxu0 0.0
        %1404 = vmatpush.msra.mxu0 0.0
        %1405 = vmatpush.msra.mxu0 0.0
        %1406 = vmatpush.msra.mxu0 0.0
        %1407 = vmatpush.msra.mxu0 0.0
        %1408 = vmatpush.msra.mxu0 0.0
        %1409 = vmatpush.msra.mxu0 0.0
        %1410 = vmatpush.msra.mxu0 0.0
        %v1411 = vand.u32 %v1240, 4294901760
        %v1412 = vsub.f32 %v1240, %v1411
        %1413 = vmatpush.msra.mxu0 %v1412
        %v1414 = vand.u32 %v1181, 4294901760
        %v1415 = vsub.f32 %v1181, %v1414
        %1416 = vmatpush.msra.mxu0 %v1415
        %v1417 = vand.u32 %v1180, 4294901760
        %v1418 = vsub.f32 %v1180, %v1417
        %1419 = vmatpush.msra.mxu0 %v1418
        %v1420 = vand.u32 %v1179, 4294901760
        %v1421 = vsub.f32 %v1179, %v1420
        %1422 = vmatpush.msra.mxu0 %v1421
        %v1423 = vand.u32 %v1178, 4294901760
        %v1424 = vsub.f32 %v1178, %v1423
        %1425 = vmatpush.msra.mxu0 %v1424
        %v1426 = vand.u32 %v1177, 4294901760
        %v1427 = vsub.f32 %v1177, %v1426
        %1428 = vmatpush.msra.mxu0 %v1427
        %v1429 = vand.u32 %v1176, 4294901760
        %v1430 = vsub.f32 %v1176, %v1429
        %1431 = vmatpush.msra.mxu0 %v1430
        %v1432 = vand.u32 %v1219, 4294901760
        %v1433 = vsub.f32 %v1219, %v1432
        %1434 = vmatmul.f32.gmra.mxu0 %v1433
        %v1435 = vpop.f32.mrf.mxu0
        %v1436 = vadd.f32 %v1376, %v1435
        %v1437 = vand.u32 %v1222, 4294901760
        %v1438 = vsub.f32 %v1222, %v1437
        %1439 = vmatmul.f32.gmra.mxu0 %v1438
        %v1440 = vpop.f32.mrf.mxu0
        %v1441 = vadd.f32 %v1380, %v1440
        %v1442 = vand.u32 %v1225, 4294901760
        %v1443 = vsub.f32 %v1225, %v1442
        %1444 = vmatmul.f32.gmra.mxu0 %v1443
        %v1445 = vpop.f32.mrf.mxu0
        %v1446 = vadd.f32 %v1384, %v1445
        %v1447 = vand.u32 %v1228, 4294901760
        %v1448 = vsub.f32 %v1228, %v1447
        %1449 = vmatmul.f32.gmra.mxu0 %v1448
        %v1450 = vpop.f32.mrf.mxu0
        %v1451 = vadd.f32 %v1388, %v1450
        %v1452 = vand.u32 %v1231, 4294901760
        %v1453 = vsub.f32 %v1231, %v1452
        %1454 = vmatmul.f32.gmra.mxu0 %v1453
        %v1455 = vpop.f32.mrf.mxu0
        %v1456 = vadd.f32 %v1392, %v1455
        %v1457 = vand.u32 %v1234, 4294901760
        %v1458 = vsub.f32 %v1234, %v1457
        %1459 = vmatmul.f32.gmra.mxu0 %v1458
        %v1460 = vpop.f32.mrf.mxu0
        %v1461 = vadd.f32 %v1396, %v1460
        %v1462 = vand.u32 %v1237, 4294901760
        %v1463 = vsub.f32 %v1237, %v1462
        %1464 = vmatmul.f32.gmra.mxu0 %v1463
        %v1465 = vpop.f32.mrf.mxu0
        %v1466 = vadd.f32 %v1400, %v1465
        %1467 = vdwg.mxu0
        %1468 = vmatpush.msra.mxu0 0.0
        %1469 = vmatpush.msra.mxu0 0.0
        %1470 = vmatpush.msra.mxu0 0.0
        %1471 = vmatpush.msra.mxu0 0.0
        %1472 = vmatpush.msra.mxu0 0.0
        %1473 = vmatpush.msra.mxu0 0.0
        %1474 = vmatpush.msra.mxu0 0.0
        %1475 = vmatpush.msra.mxu0 0.0
        %1476 = vmatpush.msra.mxu0 0.0
        %v1477 = vand.u32 %v1240, 4294901760
        %1478 = vmatpush.msra.mxu0 %v1477
        %v1479 = vand.u32 %v1181, 4294901760
        %1480 = vmatpush.msra.mxu0 %v1479
        %v1481 = vand.u32 %v1180, 4294901760
        %1482 = vmatpush.msra.mxu0 %v1481
        %v1483 = vand.u32 %v1179, 4294901760
        %1484 = vmatpush.msra.mxu0 %v1483
        %v1485 = vand.u32 %v1178, 4294901760
        %1486 = vmatpush.msra.mxu0 %v1485
        %v1487 = vand.u32 %v1177, 4294901760
        %1488 = vmatpush.msra.mxu0 %v1487
        %v1489 = vand.u32 %v1176, 4294901760
        %1490 = vmatpush.msra.mxu0 %v1489
        %v1491 = vand.u32 %v1219, 4294901760
        %v1492 = vsub.f32 %v1219, %v1491
        %v1493 = vand.u32 %v1492, 4294901760
        %1494 = vmatmul.f32.gmra.mxu0 %v1493
        %v1495 = vpop.f32.mrf.mxu0
        %v1496 = vadd.f32 %v1436, %v1495
        %v1497 = vand.u32 %v1222, 4294901760
        %v1498 = vsub.f32 %v1222, %v1497
        %v1499 = vand.u32 %v1498, 4294901760
        %1500 = vmatmul.f32.gmra.mxu0 %v1499
        %v1501 = vpop.f32.mrf.mxu0
        %v1502 = vadd.f32 %v1441, %v1501
        %v1503 = vand.u32 %v1225, 4294901760
        %v1504 = vsub.f32 %v1225, %v1503
        %v1505 = vand.u32 %v1504, 4294901760
        %1506 = vmatmul.f32.gmra.mxu0 %v1505
        %v1507 = vpop.f32.mrf.mxu0
        %v1508 = vadd.f32 %v1446, %v1507
        %v1509 = vand.u32 %v1228, 4294901760
        %v1510 = vsub.f32 %v1228, %v1509
        %v1511 = vand.u32 %v1510, 4294901760
        %1512 = vmatmul.f32.gmra.mxu0 %v1511
        %v1513 = vpop.f32.mrf.mxu0
        %v1514 = vadd.f32 %v1451, %v1513
        %v1515 = vand.u32 %v1231, 4294901760
        %v1516 = vsub.f32 %v1231, %v1515
        %v1517 = vand.u32 %v1516, 4294901760
        %1518 = vmatmul.f32.gmra.mxu0 %v1517
        %v1519 = vpop.f32.mrf.mxu0
        %v1520 = vadd.f32 %v1456, %v1519
        %v1521 = vand.u32 %v1234, 4294901760
        %v1522 = vsub.f32 %v1234, %v1521
        %v1523 = vand.u32 %v1522, 4294901760
        %1524 = vmatmul.f32.gmra.mxu0 %v1523
        %v1525 = vpop.f32.mrf.mxu0
        %v1526 = vadd.f32 %v1461, %v1525
        %v1527 = vand.u32 %v1237, 4294901760
        %v1528 = vsub.f32 %v1237, %v1527
        %v1529 = vand.u32 %v1528, 4294901760
        %1530 = vmatmul.f32.gmra.mxu0 %v1529
        %v1531 = vpop.f32.mrf.mxu0
        %v1532 = vadd.f32 %v1466, %v1531
        %1533 = vdwg.mxu0
        %1534 = vmatpush.msra.mxu0 0.0
        %1535 = vmatpush.msra.mxu0 0.0
        %1536 = vmatpush.msra.mxu0 0.0
        %1537 = vmatpush.msra.mxu0 0.0
        %1538 = vmatpush.msra.mxu0 0.0
        %1539 = vmatpush.msra.mxu0 0.0
        %1540 = vmatpush.msra.mxu0 0.0
        %1541 = vmatpush.msra.mxu0 0.0
        %1542 = vmatpush.msra.mxu0 0.0
        %v1543 = vand.u32 %v1240, 4294901760
        %v1544 = vsub.f32 %v1240, %v1543
        %v1545 = vand.u32 %v1544, 4294901760
        %1546 = vmatpush.msra.mxu0 %v1545
        %v1547 = vand.u32 %v1181, 4294901760
        %v1548 = vsub.f32 %v1181, %v1547
        %v1549 = vand.u32 %v1548, 4294901760
        %1550 = vmatpush.msra.mxu0 %v1549
        %v1551 = vand.u32 %v1180, 4294901760
        %v1552 = vsub.f32 %v1180, %v1551
        %v1553 = vand.u32 %v1552, 4294901760
        %1554 = vmatpush.msra.mxu0 %v1553
        %v1555 = vand.u32 %v1179, 4294901760
        %v1556 = vsub.f32 %v1179, %v1555
        %v1557 = vand.u32 %v1556, 4294901760
        %1558 = vmatpush.msra.mxu0 %v1557
        %v1559 = vand.u32 %v1178, 4294901760
        %v1560 = vsub.f32 %v1178, %v1559
        %v1561 = vand.u32 %v1560, 4294901760
        %1562 = vmatpush.msra.mxu0 %v1561
        %v1563 = vand.u32 %v1177, 4294901760
        %v1564 = vsub.f32 %v1177, %v1563
        %v1565 = vand.u32 %v1564, 4294901760
        %1566 = vmatpush.msra.mxu0 %v1565
        %v1567 = vand.u32 %v1176, 4294901760
        %v1568 = vsub.f32 %v1176, %v1567
        %v1569 = vand.u32 %v1568, 4294901760
        %1570 = vmatpush.msra.mxu0 %v1569
        %v1571 = vand.u32 %v1219, 4294901760
        %1572 = vmatmul.f32.gmra.mxu0 %v1571
        %v1573 = vpop.f32.mrf.mxu0
        %v1574 = vadd.f32 %v1496, %v1573
        %v1575 = vand.u32 %v1222, 4294901760
        %1576 = vmatmul.f32.gmra.mxu0 %v1575
        %v1577 = vpop.f32.mrf.mxu0
        %v1578 = vadd.f32 %v1502, %v1577
        %v1579 = vand.u32 %v1225, 4294901760
        %1580 = vmatmul.f32.gmra.mxu0 %v1579
        %v1581 = vpop.f32.mrf.mxu0
        %v1582 = vadd.f32 %v1508, %v1581
        %v1583 = vand.u32 %v1228, 4294901760
        %1584 = vmatmul.f32.gmra.mxu0 %v1583
        %v1585 = vpop.f32.mrf.mxu0
        %v1586 = vadd.f32 %v1514, %v1585
        %v1587 = vand.u32 %v1231, 4294901760
        %1588 = vmatmul.f32.gmra.mxu0 %v1587
        %v1589 = vpop.f32.mrf.mxu0
        %v1590 = vadd.f32 %v1520, %v1589
        %v1591 = vand.u32 %v1234, 4294901760
        %1592 = vmatmul.f32.gmra.mxu0 %v1591
        %v1593 = vpop.f32.mrf.mxu0
        %v1594 = vadd.f32 %v1526, %v1593
        %v1595 = vand.u32 %v1237, 4294901760
        %1596 = vmatmul.f32.gmra.mxu0 %v1595
        %v1597 = vpop.f32.mrf.mxu0
        %v1598 = vadd.f32 %v1532, %v1597
        %1599 = vdwg.mxu0
        %1600 = vmatpush.msra.mxu0 0.0
        %1601 = vmatpush.msra.mxu0 0.0
        %1602 = vmatpush.msra.mxu0 0.0
        %1603 = vmatpush.msra.mxu0 0.0
        %1604 = vmatpush.msra.mxu0 0.0
        %1605 = vmatpush.msra.mxu0 0.0
        %1606 = vmatpush.msra.mxu0 0.0
        %1607 = vmatpush.msra.mxu0 0.0
        %1608 = vmatpush.msra.mxu0 0.0
        %v1609 = vand.u32 %v1240, 4294901760
        %1610 = vmatpush.msra.mxu0 %v1609
        %v1611 = vand.u32 %v1181, 4294901760
        %1612 = vmatpush.msra.mxu0 %v1611
        %v1613 = vand.u32 %v1180, 4294901760
        %1614 = vmatpush.msra.mxu0 %v1613
        %v1615 = vand.u32 %v1179, 4294901760
        %1616 = vmatpush.msra.mxu0 %v1615
        %v1617 = vand.u32 %v1178, 4294901760
        %1618 = vmatpush.msra.mxu0 %v1617
        %v1619 = vand.u32 %v1177, 4294901760
        %1620 = vmatpush.msra.mxu0 %v1619
        %v1621 = vand.u32 %v1176, 4294901760
        %1622 = vmatpush.msra.mxu0 %v1621
        %v1623 = vand.u32 %v1219, 4294901760
        %1624 = vmatmul.f32.gmra.mxu0 %v1623
        %v1625 = vpop.f32.mrf.mxu0
        %v1626 = vadd.f32 %v1574, %v1625
        %v1627 = vand.u32 %v1222, 4294901760
        %1628 = vmatmul.f32.gmra.mxu0 %v1627
        %v1629 = vpop.f32.mrf.mxu0
        %v1630 = vadd.f32 %v1578, %v1629
        %v1631 = vand.u32 %v1225, 4294901760
        %1632 = vmatmul.f32.gmra.mxu0 %v1631
        %v1633 = vpop.f32.mrf.mxu0
        %v1634 = vadd.f32 %v1582, %v1633
        %v1635 = vand.u32 %v1228, 4294901760
        %1636 = vmatmul.f32.gmra.mxu0 %v1635
        %v1637 = vpop.f32.mrf.mxu0
        %v1638 = vadd.f32 %v1586, %v1637
        %v1639 = vand.u32 %v1231, 4294901760
        %1640 = vmatmul.f32.gmra.mxu0 %v1639
        %v1641 = vpop.f32.mrf.mxu0
        %v1642 = vadd.f32 %v1590, %v1641
        %v1643 = vand.u32 %v1234, 4294901760
        %1644 = vmatmul.f32.gmra.mxu0 %v1643
        %v1645 = vpop.f32.mrf.mxu0
        %v1646 = vadd.f32 %v1594, %v1645
        %v1647 = vand.u32 %v1237, 4294901760
        %1648 = vmatmul.f32.gmra.mxu0 %v1647
        %v1649 = vpop.f32.mrf.mxu0
        %v1650 = vadd.f32 %v1598, %v1649
        %1651 = vdwg.mxu0
        %v1652 = vtanh.pop %v1626
        %v1653 = vtanh.pop %v1630
        %v1654 = vtanh.pop %v1634
        %v1655 = vtanh.pop %v1638
        %v1656 = vtanh.pop %v1642
        %v1657 = vtanh.pop %v1646
        %v1658 = vtanh.pop %v1650
        %1660 = vset.pattern.permute.xlu0 0
        %1661 = vperm.xlu0 %1660, %v455
        %v1662 = vpop.permute.xlu0 %1661
        %1665 = vset.pattern.permute.xlu0 0
        %1666 = vperm.xlu0 %1665, %v456
        %v1667 = vpop.permute.xlu0 %1666
        %1670 = vset.pattern.permute.xlu0 0
        %1671 = vperm.xlu0 %1670, %v457
        %v1672 = vpop.permute.xlu0 %1671
        %1675 = vset.pattern.permute.xlu0 0
        %1676 = vperm.xlu0 %1675, %v458
        %v1677 = vpop.permute.xlu0 %1676
        %1680 = vset.pattern.permute.xlu0 0
        %1681 = vperm.xlu0 %1680, %v459
        %v1682 = vpop.permute.xlu0 %1681
        %1685 = vset.pattern.permute.xlu0 0
        %1686 = vperm.xlu0 %1685, %v460
        %v1687 = vpop.permute.xlu0 %1686
        %1690 = vset.pattern.permute.xlu0 0
        %1691 = vperm.xlu0 %1690, %v461
        %v1692 = vpop.permute.xlu0 %1691
        %v1695 = vsel %vm740, %v424, 0
        %v1698 = vsel %vm740, %v425, 0
        %v1701 = vsel %vm740, %v426, 0
        %v1704 = vsel %vm740, %v427, 0
        %v1707 = vsel %vm740, %v428, 0
        %v1710 = vsel %vm740, %v429, 0
        %v1713 = vsel %vm740, %v430, 0
        %v1716 = vsel %vm762, %v1658, 0
        %1718 = vmatpush.msra.mxu0 0.0
        %1719 = vmatpush.msra.mxu0 0.0
        %1720 = vmatpush.msra.mxu0 0.0
        %1721 = vmatpush.msra.mxu0 0.0
        %1722 = vmatpush.msra.mxu0 0.0
        %1723 = vmatpush.msra.mxu0 0.0
        %1724 = vmatpush.msra.mxu0 0.0
        %1725 = vmatpush.msra.mxu0 0.0
        %1726 = vmatpush.msra.mxu0 0.0
        %v1727 = vand.u32 %v1716, 4294901760
        %1728 = vmatpush.msra.mxu0 %v1727
        %v1729 = vand.u32 %v1657, 4294901760
        %1730 = vmatpush.msra.mxu0 %v1729
        %v1731 = vand.u32 %v1656, 4294901760
        %1732 = vmatpush.msra.mxu0 %v1731
        %v1733 = vand.u32 %v1655, 4294901760
        %1734 = vmatpush.msra.mxu0 %v1733
        %v1735 = vand.u32 %v1654, 4294901760
        %1736 = vmatpush.msra.mxu0 %v1735
        %v1737 = vand.u32 %v1653, 4294901760
        %1738 = vmatpush.msra.mxu0 %v1737
        %v1739 = vand.u32 %v1652, 4294901760
        %1740 = vmatpush.msra.mxu0 %v1739
        %v1741 = vand.u32 %v1695, 4294901760
        %v1742 = vsub.f32 %v1695, %v1741
        %v1743 = vand.u32 %v1742, 4294901760
        %v1744 = vsub.f32 %v1742, %v1743
        %v1745 = vand.u32 %v1744, 4294901760
        %1746 = vmatmul.f32.gmra.mxu0 %v1745
        %v1747 = vpop.f32.mrf.mxu0
        %v1748 = vadd.f32 %v1662, %v1747
        %v1749 = vand.u32 %v1698, 4294901760
        %v1750 = vsub.f32 %v1698, %v1749
        %v1751 = vand.u32 %v1750, 4294901760
        %v1752 = vsub.f32 %v1750, %v1751
        %v1753 = vand.u32 %v1752, 4294901760
        %1754 = vmatmul.f32.gmra.mxu0 %v1753
        %v1755 = vpop.f32.mrf.mxu0
        %v1756 = vadd.f32 %v1667, %v1755
        %v1757 = vand.u32 %v1701, 4294901760
        %v1758 = vsub.f32 %v1701, %v1757
        %v1759 = vand.u32 %v1758, 4294901760
        %v1760 = vsub.f32 %v1758, %v1759
        %v1761 = vand.u32 %v1760, 4294901760
        %1762 = vmatmul.f32.gmra.mxu0 %v1761
        %v1763 = vpop.f32.mrf.mxu0
        %v1764 = vadd.f32 %v1672, %v1763
        %v1765 = vand.u32 %v1704, 4294901760
        %v1766 = vsub.f32 %v1704, %v1765
        %v1767 = vand.u32 %v1766, 4294901760
        %v1768 = vsub.f32 %v1766, %v1767
        %v1769 = vand.u32 %v1768, 4294901760
        %1770 = vmatmul.f32.gmra.mxu0 %v1769
        %v1771 = vpop.f32.mrf.mxu0
        %v1772 = vadd.f32 %v1677, %v1771
        %v1773 = vand.u32 %v1707, 4294901760
        %v1774 = vsub.f32 %v1707, %v1773
        %v1775 = vand.u32 %v1774, 4294901760
        %v1776 = vsub.f32 %v1774, %v1775
        %v1777 = vand.u32 %v1776, 4294901760
        %1778 = vmatmul.f32.gmra.mxu0 %v1777
        %v1779 = vpop.f32.mrf.mxu0
        %v1780 = vadd.f32 %v1682, %v1779
        %v1781 = vand.u32 %v1710, 4294901760
        %v1782 = vsub.f32 %v1710, %v1781
        %v1783 = vand.u32 %v1782, 4294901760
        %v1784 = vsub.f32 %v1782, %v1783
        %v1785 = vand.u32 %v1784, 4294901760
        %1786 = vmatmul.f32.gmra.mxu0 %v1785
        %v1787 = vpop.f32.mrf.mxu0
        %v1788 = vadd.f32 %v1687, %v1787
        %v1789 = vand.u32 %v1713, 4294901760
        %v1790 = vsub.f32 %v1713, %v1789
        %v1791 = vand.u32 %v1790, 4294901760
        %v1792 = vsub.f32 %v1790, %v1791
        %v1793 = vand.u32 %v1792, 4294901760
        %1794 = vmatmul.f32.gmra.mxu0 %v1793
        %v1795 = vpop.f32.mrf.mxu0
        %v1796 = vadd.f32 %v1692, %v1795
        %1797 = vdwg.mxu0
        %1798 = vmatpush.msra.mxu0 0.0
        %1799 = vmatpush.msra.mxu0 0.0
        %1800 = vmatpush.msra.mxu0 0.0
        %1801 = vmatpush.msra.mxu0 0.0
        %1802 = vmatpush.msra.mxu0 0.0
        %1803 = vmatpush.msra.mxu0 0.0
        %1804 = vmatpush.msra.mxu0 0.0
        %1805 = vmatpush.msra.mxu0 0.0
        %1806 = vmatpush.msra.mxu0 0.0
        %v1807 = vand.u32 %v1716, 4294901760
        %v1808 = vsub.f32 %v1716, %v1807
        %v1809 = vand.u32 %v1808, 4294901760
        %v1810 = vsub.f32 %v1808, %v1809
        %v1811 = vand.u32 %v1810, 4294901760
        %1812 = vmatpush.msra.mxu0 %v1811
        %v1813 = vand.u32 %v1657, 4294901760
        %v1814 = vsub.f32 %v1657, %v1813
        %v1815 = vand.u32 %v1814, 4294901760
        %v1816 = vsub.f32 %v1814, %v1815
        %v1817 = vand.u32 %v1816, 4294901760
        %1818 = vmatpush.msra.mxu0 %v1817
        %v1819 = vand.u32 %v1656, 4294901760
        %v1820 = vsub.f32 %v1656, %v1819
        %v1821 = vand.u32 %v1820, 4294901760
        %v1822 = vsub.f32 %v1820, %v1821
        %v1823 = vand.u32 %v1822, 4294901760
        %1824 = vmatpush.msra.mxu0 %v1823
        %v1825 = vand.u32 %v1655, 4294901760
        %v1826 = vsub.f32 %v1655, %v1825
        %v1827 = vand.u32 %v1826, 4294901760
        %v1828 = vsub.f32 %v1826, %v1827
        %v1829 = vand.u32 %v1828, 4294901760
        %1830 = vmatpush.msra.mxu0 %v1829
        %v1831 = vand.u32 %v1654, 4294901760
        %v1832 = vsub.f32 %v1654, %v1831
        %v1833 = vand.u32 %v1832, 4294901760
        %v1834 = vsub.f32 %v1832, %v1833
        %v1835 = vand.u32 %v1834, 4294901760
        %1836 = vmatpush.msra.mxu0 %v1835
        %v1837 = vand.u32 %v1653, 4294901760
        %v1838 = vsub.f32 %v1653, %v1837
        %v1839 = vand.u32 %v1838, 4294901760
        %v1840 = vsub.f32 %v1838, %v1839
        %v1841 = vand.u32 %v1840, 4294901760
        %1842 = vmatpush.msra.mxu0 %v1841
        %v1843 = vand.u32 %v1652, 4294901760
        %v1844 = vsub.f32 %v1652, %v1843
        %v1845 = vand.u32 %v1844, 4294901760
        %v1846 = vsub.f32 %v1844, %v1845
        %v1847 = vand.u32 %v1846, 4294901760
        %1848 = vmatpush.msra.mxu0 %v1847
        %v1849 = vand.u32 %v1695, 4294901760
        %1850 = vmatmul.f32.gmra.mxu0 %v1849
        %v1851 = vpop.f32.mrf.mxu0
        %v1852 = vadd.f32 %v1748, %v1851
        %v1853 = vand.u32 %v1698, 4294901760
        %1854 = vmatmul.f32.gmra.mxu0 %v1853
        %v1855 = vpop.f32.mrf.mxu0
        %v1856 = vadd.f32 %v1756, %v1855
        %v1857 = vand.u32 %v1701, 4294901760
        %1858 = vmatmul.f32.gmra.mxu0 %v1857
        %v1859 = vpop.f32.mrf.mxu0
        %v1860 = vadd.f32 %v1764, %v1859
        %v1861 = vand.u32 %v1704, 4294901760
        %1862 = vmatmul.f32.gmra.mxu0 %v1861
        %v1863 = vpop.f32.mrf.mxu0
        %v1864 = vadd.f32 %v1772, %v1863
        %v1865 = vand.u32 %v1707, 4294901760
        %1866 = vmatmul.f32.gmra.mxu0 %v1865
        %v1867 = vpop.f32.mrf.mxu0
        %v1868 = vadd.f32 %v1780, %v1867
        %v1869 = vand.u32 %v1710, 4294901760
        %1870 = vmatmul.f32.gmra.mxu0 %v1869
        %v1871 = vpop.f32.mrf.mxu0
        %v1872 = vadd.f32 %v1788, %v1871
        %v1873 = vand.u32 %v1713, 4294901760
        %1874 = vmatmul.f32.gmra.mxu0 %v1873
        %v1875 = vpop.f32.mrf.mxu0
        %v1876 = vadd.f32 %v1796, %v1875
        %1877 = vdwg.mxu0
        %1878 = vmatpush.msra.mxu0 0.0
        %1879 = vmatpush.msra.mxu0 0.0
        %1880 = vmatpush.msra.mxu0 0.0
        %1881 = vmatpush.msra.mxu0 0.0
        %1882 = vmatpush.msra.mxu0 0.0
        %1883 = vmatpush.msra.mxu0 0.0
        %1884 = vmatpush.msra.mxu0 0.0
        %1885 = vmatpush.msra.mxu0 0.0
        %1886 = vmatpush.msra.mxu0 0.0
        %v1887 = vand.u32 %v1716, 4294901760
        %v1888 = vsub.f32 %v1716, %v1887
        %1889 = vmatpush.msra.mxu0 %v1888
        %v1890 = vand.u32 %v1657, 4294901760
        %v1891 = vsub.f32 %v1657, %v1890
        %1892 = vmatpush.msra.mxu0 %v1891
        %v1893 = vand.u32 %v1656, 4294901760
        %v1894 = vsub.f32 %v1656, %v1893
        %1895 = vmatpush.msra.mxu0 %v1894
        %v1896 = vand.u32 %v1655, 4294901760
        %v1897 = vsub.f32 %v1655, %v1896
        %1898 = vmatpush.msra.mxu0 %v1897
        %v1899 = vand.u32 %v1654, 4294901760
        %v1900 = vsub.f32 %v1654, %v1899
        %1901 = vmatpush.msra.mxu0 %v1900
        %v1902 = vand.u32 %v1653, 4294901760
        %v1903 = vsub.f32 %v1653, %v1902
        %1904 = vmatpush.msra.mxu0 %v1903
        %v1905 = vand.u32 %v1652, 4294901760
        %v1906 = vsub.f32 %v1652, %v1905
        %1907 = vmatpush.msra.mxu0 %v1906
        %v1908 = vand.u32 %v1695, 4294901760
        %v1909 = vsub.f32 %v1695, %v1908
        %1910 = vmatmul.f32.gmra.mxu0 %v1909
        %v1911 = vpop.f32.mrf.mxu0
        %v1912 = vadd.f32 %v1852, %v1911
        %v1913 = vand.u32 %v1698, 4294901760
        %v1914 = vsub.f32 %v1698, %v1913
        %1915 = vmatmul.f32.gmra.mxu0 %v1914
        %v1916 = vpop.f32.mrf.mxu0
        %v1917 = vadd.f32 %v1856, %v1916
        %v1918 = vand.u32 %v1701, 4294901760
        %v1919 = vsub.f32 %v1701, %v1918
        %1920 = vmatmul.f32.gmra.mxu0 %v1919
        %v1921 = vpop.f32.mrf.mxu0
        %v1922 = vadd.f32 %v1860, %v1921
        %v1923 = vand.u32 %v1704, 4294901760
        %v1924 = vsub.f32 %v1704, %v1923
        %1925 = vmatmul.f32.gmra.mxu0 %v1924
        %v1926 = vpop.f32.mrf.mxu0
        %v1927 = vadd.f32 %v1864, %v1926
        %v1928 = vand.u32 %v1707, 4294901760
        %v1929 = vsub.f32 %v1707, %v1928
        %1930 = vmatmul.f32.gmra.mxu0 %v1929
        %v1931 = vpop.f32.mrf.mxu0
        %v1932 = vadd.f32 %v1868, %v1931
        %v1933 = vand.u32 %v1710, 4294901760
        %v1934 = vsub.f32 %v1710, %v1933
        %1935 = vmatmul.f32.gmra.mxu0 %v1934
        %v1936 = vpop.f32.mrf.mxu0
        %v1937 = vadd.f32 %v1872, %v1936
        %v1938 = vand.u32 %v1713, 4294901760
        %v1939 = vsub.f32 %v1713, %v1938
        %1940 = vmatmul.f32.gmra.mxu0 %v1939
        %v1941 = vpop.f32.mrf.mxu0
        %v1942 = vadd.f32 %v1876, %v1941
        %1943 = vdwg.mxu0
        %1944 = vmatpush.msra.mxu0 0.0
        %1945 = vmatpush.msra.mxu0 0.0
        %1946 = vmatpush.msra.mxu0 0.0
        %1947 = vmatpush.msra.mxu0 0.0
        %1948 = vmatpush.msra.mxu0 0.0
        %1949 = vmatpush.msra.mxu0 0.0
        %1950 = vmatpush.msra.mxu0 0.0
        %1951 = vmatpush.msra.mxu0 0.0
        %1952 = vmatpush.msra.mxu0 0.0
        %v1953 = vand.u32 %v1716, 4294901760
        %1954 = vmatpush.msra.mxu0 %v1953
        %v1955 = vand.u32 %v1657, 4294901760
        %1956 = vmatpush.msra.mxu0 %v1955
        %v1957 = vand.u32 %v1656, 4294901760
        %1958 = vmatpush.msra.mxu0 %v1957
        %v1959 = vand.u32 %v1655, 4294901760
        %1960 = vmatpush.msra.mxu0 %v1959
        %v1961 = vand.u32 %v1654, 4294901760
        %1962 = vmatpush.msra.mxu0 %v1961
        %v1963 = vand.u32 %v1653, 4294901760
        %1964 = vmatpush.msra.mxu0 %v1963
        %v1965 = vand.u32 %v1652, 4294901760
        %1966 = vmatpush.msra.mxu0 %v1965
        %v1967 = vand.u32 %v1695, 4294901760
        %v1968 = vsub.f32 %v1695, %v1967
        %v1969 = vand.u32 %v1968, 4294901760
        %1970 = vmatmul.f32.gmra.mxu0 %v1969
        %v1971 = vpop.f32.mrf.mxu0
        %v1972 = vadd.f32 %v1912, %v1971
        %v1973 = vand.u32 %v1698, 4294901760
        %v1974 = vsub.f32 %v1698, %v1973
        %v1975 = vand.u32 %v1974, 4294901760
        %1976 = vmatmul.f32.gmra.mxu0 %v1975
        %v1977 = vpop.f32.mrf.mxu0
        %v1978 = vadd.f32 %v1917, %v1977
        %v1979 = vand.u32 %v1701, 4294901760
        %v1980 = vsub.f32 %v1701, %v1979
        %v1981 = vand.u32 %v1980, 4294901760
        %1982 = vmatmul.f32.gmra.mxu0 %v1981
        %v1983 = vpop.f32.mrf.mxu0
        %v1984 = vadd.f32 %v1922, %v1983
        %v1985 = vand.u32 %v1704, 4294901760
        %v1986 = vsub.f32 %v1704, %v1985
        %v1987 = vand.u32 %v1986, 4294901760
        %1988 = vmatmul.f32.gmra.mxu0 %v1987
        %v1989 = vpop.f32.mrf.mxu0
        %v1990 = vadd.f32 %v1927, %v1989
        %v1991 = vand.u32 %v1707, 4294901760
        %v1992 = vsub.f32 %v1707, %v1991
        %v1993 = vand.u32 %v1992, 4294901760
        %1994 = vmatmul.f32.gmra.mxu0 %v1993
        %v1995 = vpop.f32.mrf.mxu0
        %v1996 = vadd.f32 %v1932, %v1995
        %v1997 = vand.u32 %v1710, 4294901760
        %v1998 = vsub.f32 %v1710, %v1997
        %v1999 = vand.u32 %v1998, 4294901760
        %2000 = vmatmul.f32.gmra.mxu0 %v1999
        %v2001 = vpop.f32.mrf.mxu0
        %v2002 = vadd.f32 %v1937, %v2001
        %v2003 = vand.u32 %v1713, 4294901760
        %v2004 = vsub.f32 %v1713, %v2003
        %v2005 = vand.u32 %v2004, 4294901760
        %2006 = vmatmul.f32.gmra.mxu0 %v2005
        %v2007 = vpop.f32.mrf.mxu0
        %v2008 = vadd.f32 %v1942, %v2007
        %2009 = vdwg.mxu0
        %2010 = vmatpush.msra.mxu0 0.0
        %2011 = vmatpush.msra.mxu0 0.0
        %2012 = vmatpush.msra.mxu0 0.0
        %2013 = vmatpush.msra.mxu0 0.0
        %2014 = vmatpush.msra.mxu0 0.0
        %2015 = vmatpush.msra.mxu0 0.0
        %2016 = vmatpush.msra.mxu0 0.0
        %2017 = vmatpush.msra.mxu0 0.0
        %2018 = vmatpush.msra.mxu0 0.0
        %v2019 = vand.u32 %v1716, 4294901760
        %v2020 = vsub.f32 %v1716, %v2019
        %v2021 = vand.u32 %v2020, 4294901760
        %2022 = vmatpush.msra.mxu0 %v2021
        %v2023 = vand.u32 %v1657, 4294901760
        %v2024 = vsub.f32 %v1657, %v2023
        %v2025 = vand.u32 %v2024, 4294901760
        %2026 = vmatpush.msra.mxu0 %v2025
        %v2027 = vand.u32 %v1656, 4294901760
        %v2028 = vsub.f32 %v1656, %v2027
        %v2029 = vand.u32 %v2028, 4294901760
        %2030 = vmatpush.msra.mxu0 %v2029
        %v2031 = vand.u32 %v1655, 4294901760
        %v2032 = vsub.f32 %v1655, %v2031
        %v2033 = vand.u32 %v2032, 4294901760
        %2034 = vmatpush.msra.mxu0 %v2033
        %v2035 = vand.u32 %v1654, 4294901760
        %v2036 = vsub.f32 %v1654, %v2035
        %v2037 = vand.u32 %v2036, 4294901760
        %2038 = vmatpush.msra.mxu0 %v2037
        %v2039 = vand.u32 %v1653, 4294901760
        %v2040 = vsub.f32 %v1653, %v2039
        %v2041 = vand.u32 %v2040, 4294901760
        %2042 = vmatpush.msra.mxu0 %v2041
        %v2043 = vand.u32 %v1652, 4294901760
        %v2044 = vsub.f32 %v1652, %v2043
        %v2045 = vand.u32 %v2044, 4294901760
        %2046 = vmatpush.msra.mxu0 %v2045
        %v2047 = vand.u32 %v1695, 4294901760
        %2048 = vmatmul.f32.gmra.mxu0 %v2047
        %v2049 = vpop.f32.mrf.mxu0
        %v2050 = vadd.f32 %v1972, %v2049
        %v2051 = vand.u32 %v1698, 4294901760
        %2052 = vmatmul.f32.gmra.mxu0 %v2051
        %v2053 = vpop.f32.mrf.mxu0
        %v2054 = vadd.f32 %v1978, %v2053
        %v2055 = vand.u32 %v1701, 4294901760
        %2056 = vmatmul.f32.gmra.mxu0 %v2055
        %v2057 = vpop.f32.mrf.mxu0
        %v2058 = vadd.f32 %v1984, %v2057
        %v2059 = vand.u32 %v1704, 4294901760
        %2060 = vmatmul.f32.gmra.mxu0 %v2059
        %v2061 = vpop.f32.mrf.mxu0
        %v2062 = vadd.f32 %v1990, %v2061
        %v2063 = vand.u32 %v1707, 4294901760
        %2064 = vmatmul.f32.gmra.mxu0 %v2063
        %v2065 = vpop.f32.mrf.mxu0
        %v2066 = vadd.f32 %v1996, %v2065
        %v2067 = vand.u32 %v1710, 4294901760
        %2068 = vmatmul.f32.gmra.mxu0 %v2067
        %v2069 = vpop.f32.mrf.mxu0
        %v2070 = vadd.f32 %v2002, %v2069
        %v2071 = vand.u32 %v1713, 4294901760
        %2072 = vmatmul.f32.gmra.mxu0 %v2071
        %v2073 = vpop.f32.mrf.mxu0
        %v2074 = vadd.f32 %v2008, %v2073
        %2075 = vdwg.mxu0
        %2076 = vmatpush.msra.mxu0 0.0
        %2077 = vmatpush.msra.mxu0 0.0
        %2078 = vmatpush.msra.mxu0 0.0
        %2079 = vmatpush.msra.mxu0 0.0
        %2080 = vmatpush.msra.mxu0 0.0
        %2081 = vmatpush.msra.mxu0 0.0
        %2082 = vmatpush.msra.mxu0 0.0
        %2083 = vmatpush.msra.mxu0 0.0
        %2084 = vmatpush.msra.mxu0 0.0
        %v2085 = vand.u32 %v1716, 4294901760
        %2086 = vmatpush.msra.mxu0 %v2085
        %v2087 = vand.u32 %v1657, 4294901760
        %2088 = vmatpush.msra.mxu0 %v2087
        %v2089 = vand.u32 %v1656, 4294901760
        %2090 = vmatpush.msra.mxu0 %v2089
        %v2091 = vand.u32 %v1655, 4294901760
        %2092 = vmatpush.msra.mxu0 %v2091
        %v2093 = vand.u32 %v1654, 4294901760
        %2094 = vmatpush.msra.mxu0 %v2093
        %v2095 = vand.u32 %v1653, 4294901760
        %2096 = vmatpush.msra.mxu0 %v2095
        %v2097 = vand.u32 %v1652, 4294901760
        %2098 = vmatpush.msra.mxu0 %v2097
        %v2099 = vand.u32 %v1695, 4294901760
        %2100 = vmatmul.f32.gmra.mxu0 %v2099
        %v2101 = vpop.f32.mrf.mxu0
        %v2102 = vadd.f32 %v2050, %v2101
        %v2103 = vand.u32 %v1698, 4294901760
        %2104 = vmatmul.f32.gmra.mxu0 %v2103
        %v2105 = vpop.f32.mrf.mxu0
        %v2106 = vadd.f32 %v2054, %v2105
        %v2107 = vand.u32 %v1701, 4294901760
        %2108 = vmatmul.f32.gmra.mxu0 %v2107
        %v2109 = vpop.f32.mrf.mxu0
        %v2110 = vadd.f32 %v2058, %v2109
        %v2111 = vand.u32 %v1704, 4294901760
        %2112 = vmatmul.f32.gmra.mxu0 %v2111
        %v2113 = vpop.f32.mrf.mxu0
        %v2114 = vadd.f32 %v2062, %v2113
        %v2115 = vand.u32 %v1707, 4294901760
        %2116 = vmatmul.f32.gmra.mxu0 %v2115
        %v2117 = vpop.f32.mrf.mxu0
        %v2118 = vadd.f32 %v2066, %v2117
        %v2119 = vand.u32 %v1710, 4294901760
        %2120 = vmatmul.f32.gmra.mxu0 %v2119
        %v2121 = vpop.f32.mrf.mxu0
        %v2122 = vadd.f32 %v2070, %v2121
        %v2123 = vand.u32 %v1713, 4294901760
        %2124 = vmatmul.f32.gmra.mxu0 %v2123
        %v2125 = vpop.f32.mrf.mxu0
        %v2126 = vadd.f32 %v2074, %v2125
        %2127 = vdwg.mxu0
        %v2128 = vtanh.pop %v2102
        %v2129 = vtanh.pop %v2106
        %v2130 = vtanh.pop %v2110
        %v2131 = vtanh.pop %v2114
        %v2132 = vtanh.pop %v2118
        %v2133 = vtanh.pop %v2122
        %v2134 = vtanh.pop %v2126
        %2136 = vset.pattern.permute.xlu0 0
        %2137 = vperm.xlu0 %2136, %v463
        %v2138 = vpop.permute.xlu0 %2137
        %2141 = vset.pattern.permute.xlu0 0
        %2142 = vperm.xlu0 %2141, %v464
        %v2143 = vpop.permute.xlu0 %2142
        %2146 = vset.pattern.permute.xlu0 0
        %2147 = vperm.xlu0 %2146, %v465
        %v2148 = vpop.permute.xlu0 %2147
        %2151 = vset.pattern.permute.xlu0 0
        %2152 = vperm.xlu0 %2151, %v466
        %v2153 = vpop.permute.xlu0 %2152
        %2156 = vset.pattern.permute.xlu0 0
        %2157 = vperm.xlu0 %2156, %v467
        %v2158 = vpop.permute.xlu0 %2157
        %2161 = vset.pattern.permute.xlu0 0
        %2162 = vperm.xlu0 %2161, %v468
        %v2163 = vpop.permute.xlu0 %2162
        %2166 = vset.pattern.permute.xlu0 0
        %2167 = vperm.xlu0 %2166, %v469
        %v2168 = vpop.permute.xlu0 %2167
        %v2171 = vsel %vm740, %v432, 0
        %v2174 = vsel %vm740, %v433, 0
        %v2177 = vsel %vm740, %v434, 0
        %v2180 = vsel %vm740, %v435, 0
        %v2183 = vsel %vm740, %v436, 0
        %v2186 = vsel %vm740, %v437, 0
        %v2189 = vsel %vm740, %v438, 0
        %v2192 = vsel %vm762, %v2134, 0
        %2194 = vmatpush.msra.mxu0 0.0
        %2195 = vmatpush.msra.mxu0 0.0
        %2196 = vmatpush.msra.mxu0 0.0
        %2197 = vmatpush.msra.mxu0 0.0
        %2198 = vmatpush.msra.mxu0 0.0
        %2199 = vmatpush.msra.mxu0 0.0
        %2200 = vmatpush.msra.mxu0 0.0
        %2201 = vmatpush.msra.mxu0 0.0
        %2202 = vmatpush.msra.mxu0 0.0
        %v2203 = vand.u32 %v2192, 4294901760
        %2204 = vmatpush.msra.mxu0 %v2203
        %v2205 = vand.u32 %v2133, 4294901760
        %2206 = vmatpush.msra.mxu0 %v2205
        %v2207 = vand.u32 %v2132, 4294901760
        %2208 = vmatpush.msra.mxu0 %v2207
        %v2209 = vand.u32 %v2131, 4294901760
        %2210 = vmatpush.msra.mxu0 %v2209
        %v2211 = vand.u32 %v2130, 4294901760
        %2212 = vmatpush.msra.mxu0 %v2211
        %v2213 = vand.u32 %v2129, 4294901760
        %2214 = vmatpush.msra.mxu0 %v2213
        %v2215 = vand.u32 %v2128, 4294901760
        %2216 = vmatpush.msra.mxu0 %v2215
        %v2217 = vand.u32 %v2171, 4294901760
        %v2218 = vsub.f32 %v2171, %v2217
        %v2219 = vand.u32 %v2218, 4294901760
        %v2220 = vsub.f32 %v2218, %v2219
        %v2221 = vand.u32 %v2220, 4294901760
        %2222 = vmatmul.f32.gmra.mxu0 %v2221
        %v2223 = vpop.f32.mrf.mxu0
        %v2224 = vadd.f32 %v2138, %v2223
        %v2225 = vand.u32 %v2174, 4294901760
        %v2226 = vsub.f32 %v2174, %v2225
        %v2227 = vand.u32 %v2226, 4294901760
        %v2228 = vsub.f32 %v2226, %v2227
        %v2229 = vand.u32 %v2228, 4294901760
        %2230 = vmatmul.f32.gmra.mxu0 %v2229
        %v2231 = vpop.f32.mrf.mxu0
        %v2232 = vadd.f32 %v2143, %v2231
        %v2233 = vand.u32 %v2177, 4294901760
        %v2234 = vsub.f32 %v2177, %v2233
        %v2235 = vand.u32 %v2234, 4294901760
        %v2236 = vsub.f32 %v2234, %v2235
        %v2237 = vand.u32 %v2236, 4294901760
        %2238 = vmatmul.f32.gmra.mxu0 %v2237
        %v2239 = vpop.f32.mrf.mxu0
        %v2240 = vadd.f32 %v2148, %v2239
        %v2241 = vand.u32 %v2180, 4294901760
        %v2242 = vsub.f32 %v2180, %v2241
        %v2243 = vand.u32 %v2242, 4294901760
        %v2244 = vsub.f32 %v2242, %v2243
        %v2245 = vand.u32 %v2244, 4294901760
        %2246 = vmatmul.f32.gmra.mxu0 %v2245
        %v2247 = vpop.f32.mrf.mxu0
        %v2248 = vadd.f32 %v2153, %v2247
        %v2249 = vand.u32 %v2183, 4294901760
        %v2250 = vsub.f32 %v2183, %v2249
        %v2251 = vand.u32 %v2250, 4294901760
        %v2252 = vsub.f32 %v2250, %v2251
        %v2253 = vand.u32 %v2252, 4294901760
        %2254 = vmatmul.f32.gmra.mxu0 %v2253
        %v2255 = vpop.f32.mrf.mxu0
        %v2256 = vadd.f32 %v2158, %v2255
        %v2257 = vand.u32 %v2186, 4294901760
        %v2258 = vsub.f32 %v2186, %v2257
        %v2259 = vand.u32 %v2258, 4294901760
        %v2260 = vsub.f32 %v2258, %v2259
        %v2261 = vand.u32 %v2260, 4294901760
        %2262 = vmatmul.f32.gmra.mxu0 %v2261
        %v2263 = vpop.f32.mrf.mxu0
        %v2264 = vadd.f32 %v2163, %v2263
        %v2265 = vand.u32 %v2189, 4294901760
        %v2266 = vsub.f32 %v2189, %v2265
        %v2267 = vand.u32 %v2266, 4294901760
        %v2268 = vsub.f32 %v2266, %v2267
        %v2269 = vand.u32 %v2268, 4294901760
        %2270 = vmatmul.f32.gmra.mxu0 %v2269
        %v2271 = vpop.f32.mrf.mxu0
        %v2272 = vadd.f32 %v2168, %v2271
        %2273 = vdwg.mxu0
        %2274 = vmatpush.msra.mxu0 0.0
        %2275 = vmatpush.msra.mxu0 0.0
        %2276 = vmatpush.msra.mxu0 0.0
        %2277 = vmatpush.msra.mxu0 0.0
        %2278 = vmatpush.msra.mxu0 0.0
        %2279 = vmatpush.msra.mxu0 0.0
        %2280 = vmatpush.msra.mxu0 0.0
        %2281 = vmatpush.msra.mxu0 0.0
        %2282 = vmatpush.msra.mxu0 0.0
        %v2283 = vand.u32 %v2192, 4294901760
        %v2284 = vsub.f32 %v2192, %v2283
        %v2285 = vand.u32 %v2284, 4294901760
        %v2286 = vsub.f32 %v2284, %v2285
        %v2287 = vand.u32 %v2286, 4294901760
        %2288 = vmatpush.msra.mxu0 %v2287
        %v2289 = vand.u32 %v2133, 4294901760
        %v2290 = vsub.f32 %v2133, %v2289
        %v2291 = vand.u32 %v2290, 4294901760
        %v2292 = vsub.f32 %v2290, %v2291
        %v2293 = vand.u32 %v2292, 4294901760
        %2294 = vmatpush.msra.mxu0 %v2293
        %v2295 = vand.u32 %v2132, 4294901760
        %v2296 = vsub.f32 %v2132, %v2295
        %v2297 = vand.u32 %v2296, 4294901760
        %v2298 = vsub.f32 %v2296, %v2297
        %v2299 = vand.u32 %v2298, 4294901760
        %2300 = vmatpush.msra.mxu0 %v2299
        %v2301 = vand.u32 %v2131, 4294901760
        %v2302 = vsub.f32 %v2131, %v2301
        %v2303 = vand.u32 %v2302, 4294901760
        %v2304 = vsub.f32 %v2302, %v2303
        %v2305 = vand.u32 %v2304, 4294901760
        %2306 = vmatpush.msra.mxu0 %v2305
        %v2307 = vand.u32 %v2130, 4294901760
        %v2308 = vsub.f32 %v2130, %v2307
        %v2309 = vand.u32 %v2308, 4294901760
        %v2310 = vsub.f32 %v2308, %v2309
        %v2311 = vand.u32 %v2310, 4294901760
        %2312 = vmatpush.msra.mxu0 %v2311
        %v2313 = vand.u32 %v2129, 4294901760
        %v2314 = vsub.f32 %v2129, %v2313
        %v2315 = vand.u32 %v2314, 4294901760
        %v2316 = vsub.f32 %v2314, %v2315
        %v2317 = vand.u32 %v2316, 4294901760
        %2318 = vmatpush.msra.mxu0 %v2317
        %v2319 = vand.u32 %v2128, 4294901760
        %v2320 = vsub.f32 %v2128, %v2319
        %v2321 = vand.u32 %v2320, 4294901760
        %v2322 = vsub.f32 %v2320, %v2321
        %v2323 = vand.u32 %v2322, 4294901760
        %2324 = vmatpush.msra.mxu0 %v2323
        %v2325 = vand.u32 %v2171, 4294901760
        %2326 = vmatmul.f32.gmra.mxu0 %v2325
        %v2327 = vpop.f32.mrf.mxu0
        %v2328 = vadd.f32 %v2224, %v2327
        %v2329 = vand.u32 %v2174, 4294901760
        %2330 = vmatmul.f32.gmra.mxu0 %v2329
        %v2331 = vpop.f32.mrf.mxu0
        %v2332 = vadd.f32 %v2232, %v2331
        %v2333 = vand.u32 %v2177, 4294901760
        %2334 = vmatmul.f32.gmra.mxu0 %v2333
        %v2335 = vpop.f32.mrf.mxu0
        %v2336 = vadd.f32 %v2240, %v2335
        %v2337 = vand.u32 %v2180, 4294901760
        %2338 = vmatmul.f32.gmra.mxu0 %v2337
        %v2339 = vpop.f32.mrf.mxu0
        %v2340 = vadd.f32 %v2248, %v2339
        %v2341 = vand.u32 %v2183, 4294901760
        %2342 = vmatmul.f32.gmra.mxu0 %v2341
        %v2343 = vpop.f32.mrf.mxu0
        %v2344 = vadd.f32 %v2256, %v2343
        %v2345 = vand.u32 %v2186, 4294901760
        %2346 = vmatmul.f32.gmra.mxu0 %v2345
        %v2347 = vpop.f32.mrf.mxu0
        %v2348 = vadd.f32 %v2264, %v2347
        %v2349 = vand.u32 %v2189, 4294901760
        %2350 = vmatmul.f32.gmra.mxu0 %v2349
        %v2351 = vpop.f32.mrf.mxu0
        %v2352 = vadd.f32 %v2272, %v2351
        %2353 = vdwg.mxu0
        %2354 = vmatpush.msra.mxu0 0.0
        %2355 = vmatpush.msra.mxu0 0.0
        %2356 = vmatpush.msra.mxu0 0.0
        %2357 = vmatpush.msra.mxu0 0.0
        %2358 = vmatpush.msra.mxu0 0.0
        %2359 = vmatpush.msra.mxu0 0.0
        %2360 = vmatpush.msra.mxu0 0.0
        %2361 = vmatpush.msra.mxu0 0.0
        %2362 = vmatpush.msra.mxu0 0.0
        %v2363 = vand.u32 %v2192, 4294901760
        %v2364 = vsub.f32 %v2192, %v2363
        %2365 = vmatpush.msra.mxu0 %v2364
        %v2366 = vand.u32 %v2133, 4294901760
        %v2367 = vsub.f32 %v2133, %v2366
        %2368 = vmatpush.msra.mxu0 %v2367
        %v2369 = vand.u32 %v2132, 4294901760
        %v2370 = vsub.f32 %v2132, %v2369
        %2371 = vmatpush.msra.mxu0 %v2370
        %v2372 = vand.u32 %v2131, 4294901760
        %v2373 = vsub.f32 %v2131, %v2372
        %2374 = vmatpush.msra.mxu0 %v2373
        %v2375 = vand.u32 %v2130, 4294901760
        %v2376 = vsub.f32 %v2130, %v2375
        %2377 = vmatpush.msra.mxu0 %v2376
        %v2378 = vand.u32 %v2129, 4294901760
        %v2379 = vsub.f32 %v2129, %v2378
        %2380 = vmatpush.msra.mxu0 %v2379
        %v2381 = vand.u32 %v2128, 4294901760
        %v2382 = vsub.f32 %v2128, %v2381
        %2383 = vmatpush.msra.mxu0 %v2382
        %v2384 = vand.u32 %v2171, 4294901760
        %v2385 = vsub.f32 %v2171, %v2384
        %2386 = vmatmul.f32.gmra.mxu0 %v2385
        %v2387 = vpop.f32.mrf.mxu0
        %v2388 = vadd.f32 %v2328, %v2387
        %v2389 = vand.u32 %v2174, 4294901760
        %v2390 = vsub.f32 %v2174, %v2389
        %2391 = vmatmul.f32.gmra.mxu0 %v2390
        %v2392 = vpop.f32.mrf.mxu0
        %v2393 = vadd.f32 %v2332, %v2392
        %v2394 = vand.u32 %v2177, 4294901760
        %v2395 = vsub.f32 %v2177, %v2394
        %2396 = vmatmul.f32.gmra.mxu0 %v2395
        %v2397 = vpop.f32.mrf.mxu0
        %v2398 = vadd.f32 %v2336, %v2397
        %v2399 = vand.u32 %v2180, 4294901760
        %v2400 = vsub.f32 %v2180, %v2399
        %2401 = vmatmul.f32.gmra.mxu0 %v2400
        %v2402 = vpop.f32.mrf.mxu0
        %v2403 = vadd.f32 %v2340, %v2402
        %v2404 = vand.u32 %v2183, 4294901760
        %v2405 = vsub.f32 %v2183, %v2404
        %2406 = vmatmul.f32.gmra.mxu0 %v2405
        %v2407 = vpop.f32.mrf.mxu0
        %v2408 = vadd.f32 %v2344, %v2407
        %v2409 = vand.u32 %v2186, 4294901760
        %v2410 = vsub.f32 %v2186, %v2409
        %2411 = vmatmul.f32.gmra.mxu0 %v2410
        %v2412 = vpop.f32.mrf.mxu0
        %v2413 = vadd.f32 %v2348, %v2412
        %v2414 = vand.u32 %v2189, 4294901760
        %v2415 = vsub.f32 %v2189, %v2414
        %2416 = vmatmul.f32.gmra.mxu0 %v2415
        %v2417 = vpop.f32.mrf.mxu0
        %v2418 = vadd.f32 %v2352, %v2417
        %2419 = vdwg.mxu0
        %2420 = vmatpush.msra.mxu0 0.0
        %2421 = vmatpush.msra.mxu0 0.0
        %2422 = vmatpush.msra.mxu0 0.0
        %2423 = vmatpush.msra.mxu0 0.0
        %2424 = vmatpush.msra.mxu0 0.0
        %2425 = vmatpush.msra.mxu0 0.0
        %2426 = vmatpush.msra.mxu0 0.0
        %2427 = vmatpush.msra.mxu0 0.0
        %2428 = vmatpush.msra.mxu0 0.0
        %v2429 = vand.u32 %v2192, 4294901760
        %2430 = vmatpush.msra.mxu0 %v2429
        %v2431 = vand.u32 %v2133, 4294901760
        %2432 = vmatpush.msra.mxu0 %v2431
        %v2433 = vand.u32 %v2132, 4294901760
        %2434 = vmatpush.msra.mxu0 %v2433
        %v2435 = vand.u32 %v2131, 4294901760
        %2436 = vmatpush.msra.mxu0 %v2435
        %v2437 = vand.u32 %v2130, 4294901760
        %2438 = vmatpush.msra.mxu0 %v2437
        %v2439 = vand.u32 %v2129, 4294901760
        %2440 = vmatpush.msra.mxu0 %v2439
        %v2441 = vand.u32 %v2128, 4294901760
        %2442 = vmatpush.msra.mxu0 %v2441
        %v2443 = vand.u32 %v2171, 4294901760
        %v2444 = vsub.f32 %v2171, %v2443
        %v2445 = vand.u32 %v2444, 4294901760
        %2446 = vmatmul.f32.gmra.mxu0 %v2445
        %v2447 = vpop.f32.mrf.mxu0
        %v2448 = vadd.f32 %v2388, %v2447
        %v2449 = vand.u32 %v2174, 4294901760
        %v2450 = vsub.f32 %v2174, %v2449
        %v2451 = vand.u32 %v2450, 4294901760
        %2452 = vmatmul.f32.gmra.mxu0 %v2451
        %v2453 = vpop.f32.mrf.mxu0
        %v2454 = vadd.f32 %v2393, %v2453
        %v2455 = vand.u32 %v2177, 4294901760
        %v2456 = vsub.f32 %v2177, %v2455
        %v2457 = vand.u32 %v2456, 4294901760
        %2458 = vmatmul.f32.gmra.mxu0 %v2457
        %v2459 = vpop.f32.mrf.mxu0
        %v2460 = vadd.f32 %v2398, %v2459
        %v2461 = vand.u32 %v2180, 4294901760
        %v2462 = vsub.f32 %v2180, %v2461
        %v2463 = vand.u32 %v2462, 4294901760
        %2464 = vmatmul.f32.gmra.mxu0 %v2463
        %v2465 = vpop.f32.mrf.mxu0
        %v2466 = vadd.f32 %v2403, %v2465
        %v2467 = vand.u32 %v2183, 4294901760
        %v2468 = vsub.f32 %v2183, %v2467
        %v2469 = vand.u32 %v2468, 4294901760
        %2470 = vmatmul.f32.gmra.mxu0 %v2469
        %v2471 = vpop.f32.mrf.mxu0
        %v2472 = vadd.f32 %v2408, %v2471
        %v2473 = vand.u32 %v2186, 4294901760
        %v2474 = vsub.f32 %v2186, %v2473
        %v2475 = vand.u32 %v2474, 4294901760
        %2476 = vmatmul.f32.gmra.mxu0 %v2475
        %v2477 = vpop.f32.mrf.mxu0
        %v2478 = vadd.f32 %v2413, %v2477
        %v2479 = vand.u32 %v2189, 4294901760
        %v2480 = vsub.f32 %v2189, %v2479
        %v2481 = vand.u32 %v2480, 4294901760
        %2482 = vmatmul.f32.gmra.mxu0 %v2481
        %v2483 = vpop.f32.mrf.mxu0
        %v2484 = vadd.f32 %v2418, %v2483
        %2485 = vdwg.mxu0
        %2486 = vmatpush.msra.mxu0 0.0
        %2487 = vmatpush.msra.mxu0 0.0
        %2488 = vmatpush.msra.mxu0 0.0
        %2489 = vmatpush.msra.mxu0 0.0
        %2490 = vmatpush.msra.mxu0 0.0
        %2491 = vmatpush.msra.mxu0 0.0
        %2492 = vmatpush.msra.mxu0 0.0
        %2493 = vmatpush.msra.mxu0 0.0
        %2494 = vmatpush.msra.mxu0 0.0
        %v2495 = vand.u32 %v2192, 4294901760
        %v2496 = vsub.f32 %v2192, %v2495
        %v2497 = vand.u32 %v2496, 4294901760
        %2498 = vmatpush.msra.mxu0 %v2497
        %v2499 = vand.u32 %v2133, 4294901760
        %v2500 = vsub.f32 %v2133, %v2499
        %v2501 = vand.u32 %v2500, 4294901760
        %2502 = vmatpush.msra.mxu0 %v2501
        %v2503 = vand.u32 %v2132, 4294901760
        %v2504 = vsub.f32 %v2132, %v2503
        %v2505 = vand.u32 %v2504, 4294901760
        %2506 = vmatpush.msra.mxu0 %v2505
        %v2507 = vand.u32 %v2131, 4294901760
        %v2508 = vsub.f32 %v2131, %v2507
        %v2509 = vand.u32 %v2508, 4294901760
        %2510 = vmatpush.msra.mxu0 %v2509
        %v2511 = vand.u32 %v2130, 4294901760
        %v2512 = vsub.f32 %v2130, %v2511
        %v2513 = vand.u32 %v2512, 4294901760
        %2514 = vmatpush.msra.mxu0 %v2513
        %v2515 = vand.u32 %v2129, 4294901760
        %v2516 = vsub.f32 %v2129, %v2515
        %v2517 = vand.u32 %v2516, 4294901760
        %2518 = vmatpush.msra.mxu0 %v2517
        %v2519 = vand.u32 %v2128, 4294901760
        %v2520 = vsub.f32 %v2128, %v2519
        %v2521 = vand.u32 %v2520, 4294901760
        %2522 = vmatpush.msra.mxu0 %v2521
        %v2523 = vand.u32 %v2171, 4294901760
        %2524 = vmatmul.f32.gmra.mxu0 %v2523
        %v2525 = vpop.f32.mrf.mxu0
        %v2526 = vadd.f32 %v2448, %v2525
        %v2527 = vand.u32 %v2174, 4294901760
        %2528 = vmatmul.f32.gmra.mxu0 %v2527
        %v2529 = vpop.f32.mrf.mxu0
        %v2530 = vadd.f32 %v2454, %v2529
        %v2531 = vand.u32 %v2177, 4294901760
        %2532 = vmatmul.f32.gmra.mxu0 %v2531
        %v2533 = vpop.f32.mrf.mxu0
        %v2534 = vadd.f32 %v2460, %v2533
        %v2535 = vand.u32 %v2180, 4294901760
        %2536 = vmatmul.f32.gmra.mxu0 %v2535
        %v2537 = vpop.f32.mrf.mxu0
        %v2538 = vadd.f32 %v2466, %v2537
        %v2539 = vand.u32 %v2183, 4294901760
        %2540 = vmatmul.f32.gmra.mxu0 %v2539
        %v2541 = vpop.f32.mrf.mxu0
        %v2542 = vadd.f32 %v2472, %v2541
        %v2543 = vand.u32 %v2186, 4294901760
        %2544 = vmatmul.f32.gmra.mxu0 %v2543
        %v2545 = vpop.f32.mrf.mxu0
        %v2546 = vadd.f32 %v2478, %v2545
        %v2547 = vand.u32 %v2189, 4294901760
        %2548 = vmatmul.f32.gmra.mxu0 %v2547
        %v2549 = vpop.f32.mrf.mxu0
        %v2550 = vadd.f32 %v2484, %v2549
        %2551 = vdwg.mxu0
        %2552 = vmatpush.msra.mxu0 0.0
        %2553 = vmatpush.msra.mxu0 0.0
        %2554 = vmatpush.msra.mxu0 0.0
        %2555 = vmatpush.msra.mxu0 0.0
        %2556 = vmatpush.msra.mxu0 0.0
        %2557 = vmatpush.msra.mxu0 0.0
        %2558 = vmatpush.msra.mxu0 0.0
        %2559 = vmatpush.msra.mxu0 0.0
        %2560 = vmatpush.msra.mxu0 0.0
        %v2561 = vand.u32 %v2192, 4294901760
        %2562 = vmatpush.msra.mxu0 %v2561
        %v2563 = vand.u32 %v2133, 4294901760
        %2564 = vmatpush.msra.mxu0 %v2563
        %v2565 = vand.u32 %v2132, 4294901760
        %2566 = vmatpush.msra.mxu0 %v2565
        %v2567 = vand.u32 %v2131, 4294901760
        %2568 = vmatpush.msra.mxu0 %v2567
        %v2569 = vand.u32 %v2130, 4294901760
        %2570 = vmatpush.msra.mxu0 %v2569
        %v2571 = vand.u32 %v2129, 4294901760
        %2572 = vmatpush.msra.mxu0 %v2571
        %v2573 = vand.u32 %v2128, 4294901760
        %2574 = vmatpush.msra.mxu0 %v2573
        %v2575 = vand.u32 %v2171, 4294901760
        %2576 = vmatmul.f32.gmra.mxu0 %v2575
        %v2577 = vpop.f32.mrf.mxu0
        %v2578 = vadd.f32 %v2526, %v2577
        %v2579 = vand.u32 %v2174, 4294901760
        %2580 = vmatmul.f32.gmra.mxu0 %v2579
        %v2581 = vpop.f32.mrf.mxu0
        %v2582 = vadd.f32 %v2530, %v2581
        %v2583 = vand.u32 %v2177, 4294901760
        %2584 = vmatmul.f32.gmra.mxu0 %v2583
        %v2585 = vpop.f32.mrf.mxu0
        %v2586 = vadd.f32 %v2534, %v2585
        %v2587 = vand.u32 %v2180, 4294901760
        %2588 = vmatmul.f32.gmra.mxu0 %v2587
        %v2589 = vpop.f32.mrf.mxu0
        %v2590 = vadd.f32 %v2538, %v2589
        %v2591 = vand.u32 %v2183, 4294901760
        %2592 = vmatmul.f32.gmra.mxu0 %v2591
        %v2593 = vpop.f32.mrf.mxu0
        %v2594 = vadd.f32 %v2542, %v2593
        %v2595 = vand.u32 %v2186, 4294901760
        %2596 = vmatmul.f32.gmra.mxu0 %v2595
        %v2597 = vpop.f32.mrf.mxu0
        %v2598 = vadd.f32 %v2546, %v2597
        %v2599 = vand.u32 %v2189, 4294901760
        %2600 = vmatmul.f32.gmra.mxu0 %v2599
        %v2601 = vpop.f32.mrf.mxu0
        %v2602 = vadd.f32 %v2550, %v2601
        %2603 = vdwg.mxu0
        %v2604 = vtanh.pop %v2578
        %v2605 = vtanh.pop %v2582
        %v2606 = vtanh.pop %v2586
        %v2607 = vtanh.pop %v2590
        %v2608 = vtanh.pop %v2594
        %v2609 = vtanh.pop %v2598
        %v2610 = vtanh.pop %v2602
        %2612 = vset.pattern.permute.xlu0 0
        %2613 = vperm.xlu0 %2612, %v471
        %v2614 = vpop.permute.xlu0 %2613
        %v2617 = vsel %vm740, %v470, 0
        %v2620 = vsel %vm762, %v2610, 0
        %2622 = vmatpush.msra.mxu0 0.0
        %2623 = vmatpush.msra.mxu0 0.0
        %2624 = vmatpush.msra.mxu0 0.0
        %2625 = vmatpush.msra.mxu0 0.0
        %2626 = vmatpush.msra.mxu0 0.0
        %2627 = vmatpush.msra.mxu0 0.0
        %2628 = vmatpush.msra.mxu0 0.0
        %2629 = vmatpush.msra.mxu0 0.0
        %2630 = vmatpush.msra.mxu0 0.0
        %v2631 = vand.u32 %v2620, 4294901760
        %2632 = vmatpush.msra.mxu0 %v2631
        %v2633 = vand.u32 %v2609, 4294901760
        %2634 = vmatpush.msra.mxu0 %v2633
        %v2635 = vand.u32 %v2608, 4294901760
        %2636 = vmatpush.msra.mxu0 %v2635
        %v2637 = vand.u32 %v2607, 4294901760
        %2638 = vmatpush.msra.mxu0 %v2637
        %v2639 = vand.u32 %v2606, 4294901760
        %2640 = vmatpush.msra.mxu0 %v2639
        %v2641 = vand.u32 %v2605, 4294901760
        %2642 = vmatpush.msra.mxu0 %v2641
        %v2643 = vand.u32 %v2604, 4294901760
        %2644 = vmatpush.msra.mxu0 %v2643
        %v2645 = vand.u32 %v2617, 4294901760
        %v2646 = vsub.f32 %v2617, %v2645
        %v2647 = vand.u32 %v2646, 4294901760
        %v2648 = vsub.f32 %v2646, %v2647
        %v2649 = vand.u32 %v2648, 4294901760
        %2650 = vmatmul.f32.gmra.mxu0 %v2649
        %v2651 = vpop.f32.mrf.mxu0
        %v2652 = vadd.f32 %v2614, %v2651
        %2653 = vdwg.mxu0
        %2654 = vmatpush.msra.mxu0 0.0
        %2655 = vmatpush.msra.mxu0 0.0
        %2656 = vmatpush.msra.mxu0 0.0
        %2657 = vmatpush.msra.mxu0 0.0
        %2658 = vmatpush.msra.mxu0 0.0
        %2659 = vmatpush.msra.mxu0 0.0
        %2660 = vmatpush.msra.mxu0 0.0
        %2661 = vmatpush.msra.mxu0 0.0
        %2662 = vmatpush.msra.mxu0 0.0
        %v2663 = vand.u32 %v2620, 4294901760
        %v2664 = vsub.f32 %v2620, %v2663
        %v2665 = vand.u32 %v2664, 4294901760
        %v2666 = vsub.f32 %v2664, %v2665
        %v2667 = vand.u32 %v2666, 4294901760
        %2668 = vmatpush.msra.mxu0 %v2667
        %v2669 = vand.u32 %v2609, 4294901760
        %v2670 = vsub.f32 %v2609, %v2669
        %v2671 = vand.u32 %v2670, 4294901760
        %v2672 = vsub.f32 %v2670, %v2671
        %v2673 = vand.u32 %v2672, 4294901760
        %2674 = vmatpush.msra.mxu0 %v2673
        %v2675 = vand.u32 %v2608, 4294901760
        %v2676 = vsub.f32 %v2608, %v2675
        %v2677 = vand.u32 %v2676, 4294901760
        %v2678 = vsub.f32 %v2676, %v2677
        %v2679 = vand.u32 %v2678, 4294901760
        %2680 = vmatpush.msra.mxu0 %v2679
        %v2681 = vand.u32 %v2607, 4294901760
        %v2682 = vsub.f32 %v2607, %v2681
        %v2683 = vand.u32 %v2682, 4294901760
        %v2684 = vsub.f32 %v2682, %v2683
        %v2685 = vand.u32 %v2684, 4294901760
        %2686 = vmatpush.msra.mxu0 %v2685
        %v2687 = vand.u32 %v2606, 4294901760
        %v2688 = vsub.f32 %v2606, %v2687
        %v2689 = vand.u32 %v2688, 4294901760
        %v2690 = vsub.f32 %v2688, %v2689
        %v2691 = vand.u32 %v2690, 4294901760
        %2692 = vmatpush.msra.mxu0 %v2691
        %v2693 = vand.u32 %v2605, 4294901760
        %v2694 = vsub.f32 %v2605, %v2693
        %v2695 = vand.u32 %v2694, 4294901760
        %v2696 = vsub.f32 %v2694, %v2695
        %v2697 = vand.u32 %v2696, 4294901760
        %2698 = vmatpush.msra.mxu0 %v2697
        %v2699 = vand.u32 %v2604, 4294901760
        %v2700 = vsub.f32 %v2604, %v2699
        %v2701 = vand.u32 %v2700, 4294901760
        %v2702 = vsub.f32 %v2700, %v2701
        %v2703 = vand.u32 %v2702, 4294901760
        %2704 = vmatpush.msra.mxu0 %v2703
        %v2705 = vand.u32 %v2617, 4294901760
        %2706 = vmatmul.f32.gmra.mxu0 %v2705
        %v2707 = vpop.f32.mrf.mxu0
        %v2708 = vadd.f32 %v2652, %v2707
        %2709 = vdwg.mxu0
        %2710 = vmatpush.msra.mxu0 0.0
        %2711 = vmatpush.msra.mxu0 0.0
        %2712 = vmatpush.msra.mxu0 0.0
        %2713 = vmatpush.msra.mxu0 0.0
        %2714 = vmatpush.msra.mxu0 0.0
        %2715 = vmatpush.msra.mxu0 0.0
        %2716 = vmatpush.msra.mxu0 0.0
        %2717 = vmatpush.msra.mxu0 0.0
        %2718 = vmatpush.msra.mxu0 0.0
        %v2719 = vand.u32 %v2620, 4294901760
        %v2720 = vsub.f32 %v2620, %v2719
        %2721 = vmatpush.msra.mxu0 %v2720
        %v2722 = vand.u32 %v2609, 4294901760
        %v2723 = vsub.f32 %v2609, %v2722
        %2724 = vmatpush.msra.mxu0 %v2723
        %v2725 = vand.u32 %v2608, 4294901760
        %v2726 = vsub.f32 %v2608, %v2725
        %2727 = vmatpush.msra.mxu0 %v2726
        %v2728 = vand.u32 %v2607, 4294901760
        %v2729 = vsub.f32 %v2607, %v2728
        %2730 = vmatpush.msra.mxu0 %v2729
        %v2731 = vand.u32 %v2606, 4294901760
        %v2732 = vsub.f32 %v2606, %v2731
        %2733 = vmatpush.msra.mxu0 %v2732
        %v2734 = vand.u32 %v2605, 4294901760
        %v2735 = vsub.f32 %v2605, %v2734
        %2736 = vmatpush.msra.mxu0 %v2735
        %v2737 = vand.u32 %v2604, 4294901760
        %v2738 = vsub.f32 %v2604, %v2737
        %2739 = vmatpush.msra.mxu0 %v2738
        %v2740 = vand.u32 %v2617, 4294901760
        %v2741 = vsub.f32 %v2617, %v2740
        %2742 = vmatmul.f32.gmra.mxu0 %v2741
        %v2743 = vpop.f32.mrf.mxu0
        %v2744 = vadd.f32 %v2708, %v2743
        %2745 = vdwg.mxu0
        %2746 = vmatpush.msra.mxu0 0.0
        %2747 = vmatpush.msra.mxu0 0.0
        %2748 = vmatpush.msra.mxu0 0.0
        %2749 = vmatpush.msra.mxu0 0.0
        %2750 = vmatpush.msra.mxu0 0.0
        %2751 = vmatpush.msra.mxu0 0.0
        %2752 = vmatpush.msra.mxu0 0.0
        %2753 = vmatpush.msra.mxu0 0.0
        %2754 = vmatpush.msra.mxu0 0.0
        %v2755 = vand.u32 %v2620, 4294901760
        %2756 = vmatpush.msra.mxu0 %v2755
        %v2757 = vand.u32 %v2609, 4294901760
        %2758 = vmatpush.msra.mxu0 %v2757
        %v2759 = vand.u32 %v2608, 4294901760
        %2760 = vmatpush.msra.mxu0 %v2759
        %v2761 = vand.u32 %v2607, 4294901760
        %2762 = vmatpush.msra.mxu0 %v2761
        %v2763 = vand.u32 %v2606, 4294901760
        %2764 = vmatpush.msra.mxu0 %v2763
        %v2765 = vand.u32 %v2605, 4294901760
        %2766 = vmatpush.msra.mxu0 %v2765
        %v2767 = vand.u32 %v2604, 4294901760
        %2768 = vmatpush.msra.mxu0 %v2767
        %v2769 = vand.u32 %v2617, 4294901760
        %v2770 = vsub.f32 %v2617, %v2769
        %v2771 = vand.u32 %v2770, 4294901760
        %2772 = vmatmul.f32.gmra.mxu0 %v2771
        %v2773 = vpop.f32.mrf.mxu0
        %v2774 = vadd.f32 %v2744, %v2773
        %2775 = vdwg.mxu0
        %2776 = vmatpush.msra.mxu0 0.0
        %2777 = vmatpush.msra.mxu0 0.0
        %2778 = vmatpush.msra.mxu0 0.0
        %2779 = vmatpush.msra.mxu0 0.0
        %2780 = vmatpush.msra.mxu0 0.0
        %2781 = vmatpush.msra.mxu0 0.0
        %2782 = vmatpush.msra.mxu0 0.0
        %2783 = vmatpush.msra.mxu0 0.0
        %2784 = vmatpush.msra.mxu0 0.0
        %v2785 = vand.u32 %v2620, 4294901760
        %v2786 = vsub.f32 %v2620, %v2785
        %v2787 = vand.u32 %v2786, 4294901760
        %2788 = vmatpush.msra.mxu0 %v2787
        %v2789 = vand.u32 %v2609, 4294901760
        %v2790 = vsub.f32 %v2609, %v2789
        %v2791 = vand.u32 %v2790, 4294901760
        %2792 = vmatpush.msra.mxu0 %v2791
        %v2793 = vand.u32 %v2608, 4294901760
        %v2794 = vsub.f32 %v2608, %v2793
        %v2795 = vand.u32 %v2794, 4294901760
        %2796 = vmatpush.msra.mxu0 %v2795
        %v2797 = vand.u32 %v2607, 4294901760
        %v2798 = vsub.f32 %v2607, %v2797
        %v2799 = vand.u32 %v2798, 4294901760
        %2800 = vmatpush.msra.mxu0 %v2799
        %v2801 = vand.u32 %v2606, 4294901760
        %v2802 = vsub.f32 %v2606, %v2801
        %v2803 = vand.u32 %v2802, 4294901760
        %2804 = vmatpush.msra.mxu0 %v2803
        %v2805 = vand.u32 %v2605, 4294901760
        %v2806 = vsub.f32 %v2605, %v2805
        %v2807 = vand.u32 %v2806, 4294901760
        %2808 = vmatpush.msra.mxu0 %v2807
        %v2809 = vand.u32 %v2604, 4294901760
        %v2810 = vsub.f32 %v2604, %v2809
        %v2811 = vand.u32 %v2810, 4294901760
        %2812 = vmatpush.msra.mxu0 %v2811
        %v2813 = vand.u32 %v2617, 4294901760
        %2814 = vmatmul.f32.gmra.mxu0 %v2813
        %v2815 = vpop.f32.mrf.mxu0
        %v2816 = vadd.f32 %v2774, %v2815
        %2817 = vdwg.mxu0
        %2818 = vmatpush.msra.mxu0 0.0
        %2819 = vmatpush.msra.mxu0 0.0
        %2820 = vmatpush.msra.mxu0 0.0
        %2821 = vmatpush.msra.mxu0 0.0
        %2822 = vmatpush.msra.mxu0 0.0
        %2823 = vmatpush.msra.mxu0 0.0
        %2824 = vmatpush.msra.mxu0 0.0
        %2825 = vmatpush.msra.mxu0 0.0
        %2826 = vmatpush.msra.mxu0 0.0
        %v2827 = vand.u32 %v2620, 4294901760
        %2828 = vmatpush.msra.mxu0 %v2827
        %v2829 = vand.u32 %v2609, 4294901760
        %2830 = vmatpush.msra.mxu0 %v2829
        %v2831 = vand.u32 %v2608, 4294901760
        %2832 = vmatpush.msra.mxu0 %v2831
        %v2833 = vand.u32 %v2607, 4294901760
        %2834 = vmatpush.msra.mxu0 %v2833
        %v2835 = vand.u32 %v2606, 4294901760
        %2836 = vmatpush.msra.mxu0 %v2835
        %v2837 = vand.u32 %v2605, 4294901760
        %2838 = vmatpush.msra.mxu0 %v2837
        %v2839 = vand.u32 %v2604, 4294901760
        %2840 = vmatpush.msra.mxu0 %v2839
        %v2841 = vand.u32 %v2617, 4294901760
        %2842 = vmatmul.f32.gmra.mxu0 %v2841
        %v2843 = vpop.f32.mrf.mxu0
        %v2844 = vadd.f32 %v2816, %v2843
        %2845 = vdwg.mxu0
        %2846 = vst [vmem:[%s381] sm:$0xf] %v2844
        %s2847 = sand.u32 %s262, 1
        %s2848 = scalar_lea.sflag [#allocation3], %s2847
        %s2849 = sand.u32 %s262, 1
        %s2850 = smul.addr %s2849, 4
        %s2851 = scalar_lea.vmem [#allocation2], %s2850
        // Predicated region
        $region61: #{tpu_custom_call.1} parent=59 // pred_check
          %p2852 = pneg %p272
        $region62: #{tpu_custom_call.1} parent=59 // pred_check_branch
          %2854 = sbr.rel (%p2852) target = $region64
        $region63: #{tpu_custom_call.1} parent=59 // pred_region
          %2856 = vsyncadd %s2848, 0
          %s2857 = smul.addr %s24, 4
          %s2858 = scalar_lea.hbm %s10, %s2857
          %s2860 = sshll.u32 %s2851, 4
          %s2861 = int_to_ptr.vmem [resolvable:$true] %s2860
          %s2862 = sshll.u32 %s2858, 4
          %s2863 = int_to_ptr.hbm [resolvable:$true] %s2862
          %2865 = dma.vmem_to_hbm [thread:$0]  %s2861, 64, %s2863, %s2848
        $region64: #{tpu_custom_call.1} parent=59 // pred_fallthru
          _
      $region60: #{tpu_custom_call.1} parent=5 // pred_fallthru
        _
      %p2866 = scmp.le.s32.totalorder 2, %s19
      // Predicated region
      $region65: #{tpu_custom_call.1} parent=5 // pred_check
        %p2867 = pneg %p2866
      $region66: #{tpu_custom_call.1} parent=5 // pred_check_branch
        %2869 = sbr.rel (%p2867) target = $region68
      $region67: #{tpu_custom_call.1} parent=5 // pred_region
        %s2870 = ssub.s32 %s19, 2
        // Predicated region
        $region69: #{tpu_custom_call.1} parent=67 // pred_check
          %p2871 = pneg %p278
        $region70: #{tpu_custom_call.1} parent=67 // pred_check_branch
          %2873 = sbr.rel (%p2871) target = $region72
        $region71: #{tpu_custom_call.1} parent=67 // pred_region
          %s2874 = sand.u32 %s263, 1
          %s2875 = scalar_lea.sflag [#allocation3], %s2874
          %s2876 = sand.u32 %s263, 1
          %s2877 = smul.addr %s2876, 4
          %s2878 = scalar_lea.vmem [#allocation2], %s2877
          %2880 = dma.done %s2875, 64
        $region72: #{tpu_custom_call.1} parent=67 // pred_fallthru
          _
      $region68: #{tpu_custom_call.1} parent=5 // pred_fallthru
        _
    $region6: #{tpu_custom_call.1} parent=1 // loop_footer
      %s23 = sadd.s32 1, %s19
    $region7: #{tpu_custom_call.1} parent=1 // loop_footer_branch
      %18 = sbr.rel target = $region3
    $region8: #{tpu_custom_call.1} parent=1 // loop_exit
      _
    %2881 = vsyncpa [#allocation3], 1
    %s2882 = scalar_lea.sflag [#allocation3], 1
    %2883 = vsyncpa %s2882, 1

</llo_original>
